<compile_context>
chip_gen: v6e
topology: v6e:2x2x1
jax: 0.10.0
libtpu: 0.0.40
codegen_flags: <defaults>
</compile_context>

<pallas_src>
import math
from functools import partial

import jax
import jax.numpy as jnp
from jax.experimental import pallas as pl
from jax.experimental.pallas import tpu as pltpu

_VMEM_LIMIT = 48 * 1024 * 1024   # fits v7x's 64 MiB physical VMEM with headroom


def _round_up(x, m):
    return ((x + m - 1) // m) * m


# ----------------------------------------------------------------------------- kernels
def _project0_kernel(x_ref, m_ref, w_ref, b_ref, o_ref):
    """P = dropout(X) @ W0 + b0 for one tile of source rows (bf16 MXU, f32 accumulate)."""
    xd = x_ref[...] * m_ref[...]                       # bf16 inverted dropout
    o_ref[...] = jnp.dot(xd, w_ref[...],
                         preferred_element_type=jnp.float32) + b_ref[...]


def _project1_kernel(z_ref, mz_ref, mr_ref, wa_ref, wb_ref, b_ref, o_ref):
    """Q = dropout(z) @ W1[:H] + dropout(relu(z)) @ W1[H:] + b1 for one tile of rows.

    Equivalent to Linear1(dropout(concat([z, relu(z)], dim=1))) without ever
    materializing the concat; relu(z) is recomputed on the VPU instead of storing /
    reloading a 2H-wide intermediate."""
    z = z_ref[...]                                     # f32 (tm, H), already includes b0
    zd = z.astype(jnp.bfloat16) * mz_ref[...]
    rd = jnp.maximum(z, 0.0).astype(jnp.bfloat16) * mr_ref[...]
    acc = jnp.dot(zd, wa_ref[...], preferred_element_type=jnp.float32)
    acc = acc + jnp.dot(rd, wb_ref[...], preferred_element_type=jnp.float32)
    o_ref[...] = acc + b_ref[...]


def _gather_mean_kernel(neigh_ref, *refs, fanout):
    """Mean of `fanout` gathered source rows for one destination row.

    The gather itself happens in the BlockSpec index maps (neighbor table scalar-prefetched
    into SMEM); the kernel only averages the fanout (1, 1, H) blocks on the VPU."""
    del neigh_ref                                      # only used by the index maps
    src_refs = refs[:fanout]
    out_ref = refs[fanout]
    acc = src_refs[0][...]
    for r in src_refs[1:]:
        acc = acc + r[...]
    out_ref[...] = acc * jnp.float32(1.0 / fanout)     # 1/fanout applied in f32 (exact mean)


# --------------------------------------------------------------------- pallas wrappers
def _project0(x, mask, w, b, *, tm):
    n_rows, din = x.shape
    h = w.shape[1]
    return pl.pallas_call(
        _project0_kernel,
        out_shape=jax.ShapeDtypeStruct((n_rows, h), jnp.float32),
        grid=(n_rows // tm,),
        in_specs=[
            pl.BlockSpec((tm, din), lambda i: (i, 0)),      # X row tile
            pl.BlockSpec((tm, din), lambda i: (i, 0)),      # dropout mask tile
            pl.BlockSpec((din, h), lambda i: (0, 0)),       # W0 resident across row tiles
            pl.BlockSpec((1, h), lambda i: (0, 0)),         # b0 resident
        ],
        out_specs=pl.BlockSpec((tm, h), lambda i: (i, 0)),
        compiler_params=pltpu.CompilerParams(
            dimension_semantics=("parallel",),
            vmem_limit_bytes=_VMEM_LIMIT),
    )(x, mask, w, b)


def _project1(z, mz, mr, wa, wb, b, *, tm):
    n_rows, h = z.shape
    c = wa.shape[1]
    return pl.pallas_call(
        _project1_kernel,
        out_shape=jax.ShapeDtypeStruct((n_rows, c), jnp.float32),
        grid=(n_rows // tm,),
        in_specs=[
            pl.BlockSpec((tm, h), lambda i: (i, 0)),        # z row tile
            pl.BlockSpec((tm, h), lambda i: (i, 0)),        # dropout mask for z half
            pl.BlockSpec((tm, h), lambda i: (i, 0)),        # dropout mask for relu(z) half
            pl.BlockSpec((h, c), lambda i: (0, 0)),         # W1[:H]  resident
            pl.BlockSpec((h, c), lambda i: (0, 0)),         # W1[H:]  resident
            pl.BlockSpec((1, c), lambda i: (0, 0)),         # b1 resident
        ],
        out_specs=pl.BlockSpec((tm, c), lambda i: (i, 0)),
        compiler_params=pltpu.CompilerParams(
            dimension_semantics=("parallel",),
            vmem_limit_bytes=_VMEM_LIMIT),
    )(z, mz, mr, wa, wb, b)


def _gather_mean(src, neigh):
    """out[i] = mean_f src[neigh[i, f]] — sparse sampled-neighbor aggregation.

    src: (N_src, H) f32; neigh: (N_dst, fanout) int32, scalar-prefetched into SMEM and
    read inside the gather index maps.  `src` is passed `fanout` times (same buffer),
    each copy gathering one neighbor row per destination row."""
    n_src, h = src.shape
    n_dst, fanout = neigh.shape
    src3 = src.reshape(n_src, 1, h)     # (1, H) trailing dims keep every block (8,128)-legal

    def gather_spec(f):
        return pl.BlockSpec((1, 1, h), lambda i, nref, f=f: (nref[i, f], 0, 0))

    out3 = pl.pallas_call(
        partial(_gather_mean_kernel, fanout=fanout),
        out_shape=jax.ShapeDtypeStruct((n_dst, 1, h), jnp.float32),
        grid_spec=pltpu.PrefetchScalarGridSpec(
            num_scalar_prefetch=1,
            grid=(n_dst,),
            in_specs=[gather_spec(f) for f in range(fanout)],
            out_specs=pl.BlockSpec((1, 1, h), lambda i, nref: (i, 0, 0)),
        ),
        compiler_params=pltpu.CompilerParams(
            dimension_semantics=("parallel",),
            vmem_limit_bytes=_VMEM_LIMIT),
    )(neigh, *([src3] * fanout))
    # TODO(synk): at Reddit scale, gather >=8 rows per grid step (page granularity) or use
    # manual make_async_copy row DMAs to avoid the (8,128) sub-tile padding of per-row DMAs.
    return out3.reshape(n_dst, h)


# ------------------------------------------------------------------------ full forward
@partial(jax.jit, static_argnames=("p", "n_classes"))
def gcn_sampling_forward(features, neigh0, neigh1, dropout_key,
                         w0p, b0, w1a, w1b, b1p, *, p, n_classes):
    n0, din = features.shape
    din_pad = w0p.shape[0]
    h = w1a.shape[0]
    n1 = neigh0.shape[0]

    neigh0 = neigh0.astype(jnp.int32)
    neigh1 = neigh1.astype(jnp.int32)

    # Row tiles: 64 keeps the toy NodeFlow multi-step; bump to 128 (v5e) / 256 (v6e, v7x)
    # for Reddit-scale NodeFlows to fill the MXU.
    tm0 = 64 if n0 >= 64 else _round_up(n0, 8)
    tm1 = 64 if n1 >= 64 else _round_up(n1, 8)
    n0p = _round_up(n0, tm0)
    n1p = _round_up(n1, tm1)

    keep_scale = 1.0 / (1.0 - p) if p > 0.0 else 1.0
    km0, kmz, kmr = jax.random.split(dropout_key, 3)

    def drop_mask(k, shape):
        # Inverted-dropout mask (0 or 1/(1-p)); 2.0 for p=0.5 is exact in bf16.
        if p == 0.0:                                   # static Python branch
            return jnp.ones(shape, jnp.bfloat16)
        keep = jax.random.bernoulli(k, 1.0 - p, shape)
        return (keep.astype(jnp.float32) * keep_scale).astype(jnp.bfloat16)
    # TODO(synk): generate masks in-kernel via pltpu.prng_seed/prng_random_bits (mixing
    # pl.program_id into the seed) when the CPU-interpret check is not required — removes
    # the HBM mask stream.

    # Lane-dense, row-padded feature slab (in_feats padded to a multiple of 128).
    xp = jnp.zeros((n0p, din_pad), jnp.bfloat16).at[:n0, :din].set(
        features.astype(jnp.bfloat16))
    m0 = drop_mask(km0, (n0p, din_pad))

    # Block 0, projection BEFORE aggregation (exact by linearity of mean and Linear):
    #   P = dropout(X) @ W0 + b0 over the N0 source rows -> gather moves H-wide rows.
    p_rows = _project0(xp, m0, w0p, b0, tm=tm0)[:n0]          # (n0, H) f32

    # Block 0 aggregation: z = mean over sampled layer-0 neighbors (gather-mean, no dense A).
    z = _gather_mean(p_rows, neigh0)                          # (n1, H) f32

    # Block 1, projection before aggregation; concat([z, relu(z)]) is never materialized.
    zp = jnp.zeros((n1p, h), jnp.float32).at[:n1].set(z)
    mz = drop_mask(kmz, (n1p, h))
    mr = drop_mask(kmr, (n1p, h))
    q = _project1(zp, mz, mr, w1a, w1b, b1p, tm=tm1)[:n1]     # (n1, Cpad) f32

    # Block 1 aggregation: out = mean over sampled layer-1 neighbors.
    out = _gather_mean(q, neigh1)                             # (n2, Cpad) f32
    return out[:, :n_classes]


class GCNSamplingPallas:
    """n_layers=1 GCNSampling: [NodeUpdate(in, hid, relu, concat=True),
                                NodeUpdate(2*hid, n_classes)] over a sampled NodeFlow."""

    def __init__(self, in_feats, n_hidden, n_classes, dropout_p, key):
        self.p = float(dropout_p)
        self.n_hidden = n_hidden
        self.n_classes = n_classes
        self.din_pad = _round_up(in_feats, 128)                 # lane-dense feature width
        self.c_pad = _round_up(max(n_classes, 128), 128)        # lane-dense classifier width

        k0, k1, k2, k3 = jax.random.split(key, 4)
        # nn.Linear(in_feats, n_hidden) default init; weight stored as (in, out)
        lim0 = 1.0 / math.sqrt(in_feats)
        w0 = jax.random.uniform(k0, (in_feats, n_hidden), jnp.float32, -lim0, lim0)
        b0 = jax.random.uniform(k1, (1, n_hidden), jnp.float32, -lim0, lim0)
        # nn.Linear(2*n_hidden, n_classes)
        lim1 = 1.0 / math.sqrt(2 * n_hidden)
        w1 = jax.random.uniform(k2, (2 * n_hidden, n_classes), jnp.float32, -lim1, lim1)
        b1 = jax.random.uniform(k3, (1, n_classes), jnp.float32, -lim1, lim1)

        # Pad in_feats with zero rows (exact) and cast MXU operands to bf16.
        self.w0p = (jnp.zeros((self.din_pad, n_hidden), jnp.float32)
                    .at[:in_feats].set(w0)).astype(jnp.bfloat16)
        self.b0 = b0                                            # f32, added to f32 accumulator
        # Split the classifier along its input: rows [:H] act on z, rows [H:] on relu(z);
        # pad n_classes out to a lane-dense width (zeros beyond n_classes).
        self.w1a = (jnp.zeros((n_hidden, self.c_pad), jnp.float32)
                    .at[:, :n_classes].set(w1[:n_hidden])).astype(jnp.bfloat16)
        self.w1b = (jnp.zeros((n_hidden, self.c_pad), jnp.float32)
                    .at[:, :n_classes].set(w1[n_hidden:])).astype(jnp.bfloat16)
        self.b1p = jnp.zeros((1, self.c_pad), jnp.float32).at[:, :n_classes].set(b1)

    def forward(self, features, neigh0, neigh1, dropout_key):
        return gcn_sampling_forward(
            features, neigh0, neigh1, dropout_key,
            self.w0p, self.b0, self.w1a, self.w1b, self.b1p,
            p=self.p, n_classes=self.n_classes)


if __name__ == "__main__":
    # Small synthetic NodeFlow (Reddit-like, tiny node counts, lane-friendly dims).
    in_feats, n_hidden, n_classes = 256, 128, 16
    N0, N1, N2 = 128, 64, 32          # nodes per NodeFlow layer
    fanout = 4                        # sampled neighbors per node
    dropout_p = 0.5

    key = jax.random.PRNGKey(0)
    kf, kn0, kn1, kp, kd = jax.random.split(key, 5)

    features = jax.random.normal(kf, (N0, in_feats), jnp.float32)
    neigh0 = jax.random.randint(kn0, (N1, fanout), 0, N0, dtype=jnp.int32)  # layer0 -> layer1
    neigh1 = jax.random.randint(kn1, (N2, fanout), 0, N1, dtype=jnp.int32)  # layer1 -> layer2

    model = GCNSamplingPallas(in_feats, n_hidden, n_classes, dropout_p, kp)
    out = model.forward(features, neigh0, neigh1, kd)
    jax.block_until_ready(out)

    assert out.shape == (N2, n_classes) and out.dtype == jnp.float32
    assert bool(jnp.all(jnp.isfinite(out)))
    print("KERNEL_OK")
</pallas_src>

<mosaic_0001>
module attributes {stable_mosaic.version = 11 : i64} {
  func.func @_project0_kernel(%arg0: i32, %arg1: memref<64x256xbf16, #tpu.memory_space<vmem>>, %arg2: memref<64x256xbf16, #tpu.memory_space<vmem>>, %arg3: memref<256x128xbf16, #tpu.memory_space<vmem>>, %arg4: memref<1x128xf32, #tpu.memory_space<vmem>>, %arg5: memref<64x128xf32, #tpu.memory_space<vmem>>) attributes {dimension_semantics = [#tpu.dimension_semantics<parallel>], iteration_bounds = array<i64: 2>, scalar_prefetch = 0 : i64, scratch_operands = 0 : i64, tpu.core_type = #tpu.core_type<tc>, window_params = [{transform_indices = @transform_0, window_bounds = array<i64: 64, 256>}, {transform_indices = @transform_1, window_bounds = array<i64: 64, 256>}, {pipeline_mode = #tpu.pipeline_mode<synchronous>, transform_indices = @transform_2, window_bounds = array<i64: 256, 128>}, {pipeline_mode = #tpu.pipeline_mode<synchronous>, transform_indices = @transform_3, window_bounds = array<i64: 1, 128>}, {transform_indices = @transform_4, window_bounds = array<i64: 64, 128>}]} {
    %c0 = arith.constant 0 : index
    %c0_0 = arith.constant 0 : index
    %0 = vector.load %arg1[%c0, %c0_0] : memref<64x256xbf16, #tpu.memory_space<vmem>>, vector<64x256xbf16>
    %c0_1 = arith.constant 0 : index
    %c0_2 = arith.constant 0 : index
    %1 = vector.load %arg2[%c0_1, %c0_2] : memref<64x256xbf16, #tpu.memory_space<vmem>>, vector<64x256xbf16>
    %2 = arith.mulf %0, %1 : vector<64x256xbf16>
    %c0_3 = arith.constant 0 : index
    %c0_4 = arith.constant 0 : index
    %3 = vector.load %arg3[%c0_3, %c0_4] : memref<256x128xbf16, #tpu.memory_space<vmem>>, vector<256x128xbf16>
    %cst = arith.constant dense<0.000000e+00> : vector<64x128xf32>
    %4 = tpu.matmul %2, %3, %cst {dimension_numbers = #tpu.dot_dimension_numbers<[1], [0], [0], [1], [0, 0, 1, 1], [], []>} : vector<64x256xbf16>, vector<256x128xbf16>, vector<64x128xf32> -> vector<64x128xf32>
    %c0_5 = arith.constant 0 : index
    %c0_6 = arith.constant 0 : index
    %5 = vector.load %arg4[%c0_5, %c0_6] : memref<1x128xf32, #tpu.memory_space<vmem>>, vector<1x128xf32>
    %6 = vector.broadcast %5 : vector<1x128xf32> to vector<64x128xf32>
    %7 = arith.addf %4, %6 : vector<64x128xf32>
    %c0_7 = arith.constant 0 : index
    %c0_8 = arith.constant 0 : index
    %8 = vector.load %arg5[%c0_7, %c0_8] : memref<64x128xf32, #tpu.memory_space<vmem>>, vector<64x128xf32>
    tpu.vector_store %arg5[%c0_7, %c0_8], %7 {strides = array<i32>} : memref<64x128xf32, #tpu.memory_space<vmem>>, vector<64x128xf32>,
    return
  }
  func.func @transform_0(%arg0: i32) -> (i32, i32) {
    %c0_i32 = arith.constant 0 : i32
    %c0_i32_0 = arith.constant 0 : i32
    return %arg0, %c0_i32 : i32, i32
  }
  func.func @transform_1(%arg0: i32) -> (i32, i32) {
    %c0_i32 = arith.constant 0 : i32
    %c0_i32_0 = arith.constant 0 : i32
    return %arg0, %c0_i32 : i32, i32
  }
  func.func @transform_2(%arg0: i32) -> (i32, i32) {
    %c0_i32 = arith.constant 0 : i32
    %c0_i32_0 = arith.constant 0 : i32
    %c0_i32_1 = arith.constant 0 : i32
    return %c0_i32, %c0_i32_0 : i32, i32
  }
  func.func @transform_3(%arg0: i32) -> (i32, i32) {
    %c0_i32 = arith.constant 0 : i32
    %c0_i32_0 = arith.constant 0 : i32
    %c0_i32_1 = arith.constant 0 : i32
    return %c0_i32, %c0_i32_0 : i32, i32
  }
  func.func @transform_4(%arg0: i32) -> (i32, i32) {
    %c0_i32 = arith.constant 0 : i32
    %c0_i32_0 = arith.constant 0 : i32
    return %arg0, %c0_i32 : i32, i32
  }
}

module attributes {stable_mosaic.version = 11 : i64} {
  func.func @_gather_mean_kernel(%arg0: i32, %arg1: memref<64x4xi32, #tpu.memory_space<smem>>, %arg2: memref<1x1x128xf32, #tpu.memory_space<vmem>>, %arg3: memref<1x1x128xf32, #tpu.memory_space<vmem>>, %arg4: memref<1x1x128xf32, #tpu.memory_space<vmem>>, %arg5: memref<1x1x128xf32, #tpu.memory_space<vmem>>, %arg6: memref<1x1x128xf32, #tpu.memory_space<vmem>>) attributes {dimension_semantics = [#tpu.dimension_semantics<parallel>], iteration_bounds = array<i64: 64>, scalar_prefetch = 1 : i64, scratch_operands = 0 : i64, tpu.core_type = #tpu.core_type<tc>, window_params = [{transform_indices = @transform_0, window_bounds = array<i64: 1, 1, 128>}, {transform_indices = @transform_1, window_bounds = array<i64: 1, 1, 128>}, {transform_indices = @transform_2, window_bounds = array<i64: 1, 1, 128>}, {transform_indices = @transform_3, window_bounds = array<i64: 1, 1, 128>}, {transform_indices = @transform_4, window_bounds = array<i64: 1, 1, 128>}]} {
    %c0 = arith.constant 0 : index
    %c0_0 = arith.constant 0 : index
    %c0_1 = arith.constant 0 : index
    %0 = vector.load %arg2[%c0, %c0_0, %c0_1] : memref<1x1x128xf32, #tpu.memory_space<vmem>>, vector<1x1x128xf32>
    %c0_2 = arith.constant 0 : index
    %c0_3 = arith.constant 0 : index
    %c0_4 = arith.constant 0 : index
    %1 = vector.load %arg3[%c0_2, %c0_3, %c0_4] : memref<1x1x128xf32, #tpu.memory_space<vmem>>, vector<1x1x128xf32>
    %2 = arith.addf %0, %1 : vector<1x1x128xf32>
    %c0_5 = arith.constant 0 : index
    %c0_6 = arith.constant 0 : index
    %c0_7 = arith.constant 0 : index
    %3 = vector.load %arg4[%c0_5, %c0_6, %c0_7] : memref<1x1x128xf32, #tpu.memory_space<vmem>>, vector<1x1x128xf32>
    %4 = arith.addf %2, %3 : vector<1x1x128xf32>
    %c0_8 = arith.constant 0 : index
    %c0_9 = arith.constant 0 : index
    %c0_10 = arith.constant 0 : index
    %5 = vector.load %arg5[%c0_8, %c0_9, %c0_10] : memref<1x1x128xf32, #tpu.memory_space<vmem>>, vector<1x1x128xf32>
    %6 = arith.addf %4, %5 : vector<1x1x128xf32>
    %cst = arith.constant 2.500000e-01 : f32
    %7 = vector.broadcast %cst : f32 to vector<1x1x128xf32>
    %8 = arith.mulf %6, %7 : vector<1x1x128xf32>
    %c0_11 = arith.constant 0 : index
    %c0_12 = arith.constant 0 : index
    %c0_13 = arith.constant 0 : index
    %9 = vector.load %arg6[%c0_11, %c0_12, %c0_13] : memref<1x1x128xf32, #tpu.memory_space<vmem>>, vector<1x1x128xf32>
    tpu.vector_store %arg6[%c0_11, %c0_12, %c0_13], %8 {strides = array<i32>} : memref<1x1x128xf32, #tpu.memory_space<vmem>>, vector<1x1x128xf32>,
    return
  }
  func.func @transform_0(%arg0: i32, %arg1: memref<64x4xi32, #tpu.memory_space<smem>>) -> (i32, i32, i32) {
    %0 = arith.index_cast %arg0 : i32 to index
    %c0 = arith.constant 0 : index
    %1 = memref.load %arg1[%0, %c0] : memref<64x4xi32, #tpu.memory_space<smem>>
    %c0_i32 = arith.constant 0 : i32
    %c0_i32_0 = arith.constant 0 : i32
    %c0_i32_1 = arith.constant 0 : i32
    return %1, %c0_i32, %c0_i32_0 : i32, i32, i32
  }
  func.func @transform_1(%arg0: i32, %arg1: memref<64x4xi32, #tpu.memory_space<smem>>) -> (i32, i32, i32) {
    %0 = arith.index_cast %arg0 : i32 to index
    %c1 = arith.constant 1 : index
    %1 = memref.load %arg1[%0, %c1] : memref<64x4xi32, #tpu.memory_space<smem>>
    %c0_i32 = arith.constant 0 : i32
    %c0_i32_0 = arith.constant 0 : i32
    %c0_i32_1 = arith.constant 0 : i32
    return %1, %c0_i32, %c0_i32_0 : i32, i32, i32
  }
  func.func @transform_2(%arg0: i32, %arg1: memref<64x4xi32, #tpu.memory_space<smem>>) -> (i32, i32, i32) {
    %0 = arith.index_cast %arg0 : i32 to index
    %c2 = arith.constant 2 : index
    %1 = memref.load %arg1[%0, %c2] : memref<64x4xi32, #tpu.memory_space<smem>>
    %c0_i32 = arith.constant 0 : i32
    %c0_i32_0 = arith.constant 0 : i32
    %c0_i32_1 = arith.constant 0 : i32
    return %1, %c0_i32, %c0_i32_0 : i32, i32, i32
  }
  func.func @transform_3(%arg0: i32, %arg1: memref<64x4xi32, #tpu.memory_space<smem>>) -> (i32, i32, i32) {
    %0 = arith.index_cast %arg0 : i32 to index
    %c3 = arith.constant 3 : index
    %1 = memref.load %arg1[%0, %c3] : memref<64x4xi32, #tpu.memory_space<smem>>
    %c0_i32 = arith.constant 0 : i32
    %c0_i32_0 = arith.constant 0 : i32
    %c0_i32_1 = arith.constant 0 : i32
    return %1, %c0_i32, %c0_i32_0 : i32, i32, i32
  }
  func.func @transform_4(%arg0: i32, %arg1: memref<64x4xi32, #tpu.memory_space<smem>>) -> (i32, i32, i32) {
    %c0_i32 = arith.constant 0 : i32
    %c0_i32_0 = arith.constant 0 : i32
    %c0_i32_1 = arith.constant 0 : i32
    return %arg0, %c0_i32, %c0_i32_0 : i32, i32, i32
  }
}

module attributes {stable_mosaic.version = 11 : i64} {
  func.func @_gather_mean_kernel(%arg0: i32, %arg1: memref<32x4xi32, #tpu.memory_space<smem>>, %arg2: memref<1x1x128xf32, #tpu.memory_space<vmem>>, %arg3: memref<1x1x128xf32, #tpu.memory_space<vmem>>, %arg4: memref<1x1x128xf32, #tpu.memory_space<vmem>>, %arg5: memref<1x1x128xf32, #tpu.memory_space<vmem>>, %arg6: memref<1x1x128xf32, #tpu.memory_space<vmem>>) attributes {dimension_semantics = [#tpu.dimension_semantics<parallel>], iteration_bounds = array<i64: 32>, scalar_prefetch = 1 : i64, scratch_operands = 0 : i64, tpu.core_type = #tpu.core_type<tc>, window_params = [{transform_indices = @transform_0, window_bounds = array<i64: 1, 1, 128>}, {transform_indices = @transform_1, window_bounds = array<i64: 1, 1, 128>}, {transform_indices = @transform_2, window_bounds = array<i64: 1, 1, 128>}, {transform_indices = @transform_3, window_bounds = array<i64: 1, 1, 128>}, {transform_indices = @transform_4, window_bounds = array<i64: 1, 1, 128>}]} {
    %c0 = arith.constant 0 : index
    %c0_0 = arith.constant 0 : index
    %c0_1 = arith.constant 0 : index
    %0 = vector.load %arg2[%c0, %c0_0, %c0_1] : memref<1x1x128xf32, #tpu.memory_space<vmem>>, vector<1x1x128xf32>
    %c0_2 = arith.constant 0 : index
    %c0_3 = arith.constant 0 : index
    %c0_4 = arith.constant 0 : index
    %1 = vector.load %arg3[%c0_2, %c0_3, %c0_4] : memref<1x1x128xf32, #tpu.memory_space<vmem>>, vector<1x1x128xf32>
    %2 = arith.addf %0, %1 : vector<1x1x128xf32>
    %c0_5 = arith.constant 0 : index
    %c0_6 = arith.constant 0 : index
    %c0_7 = arith.constant 0 : index
    %3 = vector.load %arg4[%c0_5, %c0_6, %c0_7] : memref<1x1x128xf32, #tpu.memory_space<vmem>>, vector<1x1x128xf32>
    %4 = arith.addf %2, %3 : vector<1x1x128xf32>
    %c0_8 = arith.constant 0 : index
    %c0_9 = arith.constant 0 : index
    %c0_10 = arith.constant 0 : index
    %5 = vector.load %arg5[%c0_8, %c0_9, %c0_10] : memref<1x1x128xf32, #tpu.memory_space<vmem>>, vector<1x1x128xf32>
    %6 = arith.addf %4, %5 : vector<1x1x128xf32>
    %cst = arith.constant 2.500000e-01 : f32
    %7 = vector.broadcast %cst : f32 to vector<1x1x128xf32>
    %8 = arith.mulf %6, %7 : vector<1x1x128xf32>
    %c0_11 = arith.constant 0 : index
    %c0_12 = arith.constant 0 : index
    %c0_13 = arith.constant 0 : index
    %9 = vector.load %arg6[%c0_11, %c0_12, %c0_13] : memref<1x1x128xf32, #tpu.memory_space<vmem>>, vector<1x1x128xf32>
    tpu.vector_store %arg6[%c0_11, %c0_12, %c0_13], %8 {strides = array<i32>} : memref<1x1x128xf32, #tpu.memory_space<vmem>>, vector<1x1x128xf32>,
    return
  }
  func.func @transform_0(%arg0: i32, %arg1: memref<32x4xi32, #tpu.memory_space<smem>>) -> (i32, i32, i32) {
    %0 = arith.index_cast %arg0 : i32 to index
    %c0 = arith.constant 0 : index
    %1 = memref.load %arg1[%0, %c0] : memref<32x4xi32, #tpu.memory_space<smem>>
    %c0_i32 = arith.constant 0 : i32
    %c0_i32_0 = arith.constant 0 : i32
    %c0_i32_1 = arith.constant 0 : i32
    return %1, %c0_i32, %c0_i32_0 : i32, i32, i32
  }
  func.func @transform_1(%arg0: i32, %arg1: memref<32x4xi32, #tpu.memory_space<smem>>) -> (i32, i32, i32) {
    %0 = arith.index_cast %arg0 : i32 to index
    %c1 = arith.constant 1 : index
    %1 = memref.load %arg1[%0, %c1] : memref<32x4xi32, #tpu.memory_space<smem>>
    %c0_i32 = arith.constant 0 : i32
    %c0_i32_0 = arith.constant 0 : i32
    %c0_i32_1 = arith.constant 0 : i32
    return %1, %c0_i32, %c0_i32_0 : i32, i32, i32
  }
  func.func @transform_2(%arg0: i32, %arg1: memref<32x4xi32, #tpu.memory_space<smem>>) -> (i32, i32, i32) {
    %0 = arith.index_cast %arg0 : i32 to index
    %c2 = arith.constant 2 : index
    %1 = memref.load %arg1[%0, %c2] : memref<32x4xi32, #tpu.memory_space<smem>>
    %c0_i32 = arith.constant 0 : i32
    %c0_i32_0 = arith.constant 0 : i32
    %c0_i32_1 = arith.constant 0 : i32
    return %1, %c0_i32, %c0_i32_0 : i32, i32, i32
  }
  func.func @transform_3(%arg0: i32, %arg1: memref<32x4xi32, #tpu.memory_space<smem>>) -> (i32, i32, i32) {
    %0 = arith.index_cast %arg0 : i32 to index
    %c3 = arith.constant 3 : index
    %1 = memref.load %arg1[%0, %c3] : memref<32x4xi32, #tpu.memory_space<smem>>
    %c0_i32 = arith.constant 0 : i32
    %c0_i32_0 = arith.constant 0 : i32
    %c0_i32_1 = arith.constant 0 : i32
    return %1, %c0_i32, %c0_i32_0 : i32, i32, i32
  }
  func.func @transform_4(%arg0: i32, %arg1: memref<32x4xi32, #tpu.memory_space<smem>>) -> (i32, i32, i32) {
    %c0_i32 = arith.constant 0 : i32
    %c0_i32_0 = arith.constant 0 : i32
    %c0_i32_1 = arith.constant 0 : i32
    return %arg0, %c0_i32, %c0_i32_0 : i32, i32, i32
  }
}

module attributes {stable_mosaic.version = 11 : i64} {
  func.func @_project1_kernel(%arg0: i32, %arg1: memref<64x128xf32, #tpu.memory_space<vmem>>, %arg2: memref<64x128xbf16, #tpu.memory_space<vmem>>, %arg3: memref<64x128xbf16, #tpu.memory_space<vmem>>, %arg4: memref<128x128xbf16, #tpu.memory_space<vmem>>, %arg5: memref<128x128xbf16, #tpu.memory_space<vmem>>, %arg6: memref<1x128xf32, #tpu.memory_space<vmem>>, %arg7: memref<64x128xf32, #tpu.memory_space<vmem>>) attributes {dimension_semantics = [#tpu.dimension_semantics<parallel>], iteration_bounds = array<i64: 1>, scalar_prefetch = 0 : i64, scratch_operands = 0 : i64, tpu.core_type = #tpu.core_type<tc>, window_params = [{transform_indices = @transform_0, window_bounds = array<i64: 64, 128>}, {transform_indices = @transform_1, window_bounds = array<i64: 64, 128>}, {transform_indices = @transform_2, window_bounds = array<i64: 64, 128>}, {pipeline_mode = #tpu.pipeline_mode<synchronous>, transform_indices = @transform_3, window_bounds = array<i64: 128, 128>}, {pipeline_mode = #tpu.pipeline_mode<synchronous>, transform_indices = @transform_4, window_bounds = array<i64: 128, 128>}, {pipeline_mode = #tpu.pipeline_mode<synchronous>, transform_indices = @transform_5, window_bounds = array<i64: 1, 128>}, {transform_indices = @transform_6, window_bounds = array<i64: 64, 128>}]} {
    %c0 = arith.constant 0 : index
    %c0_0 = arith.constant 0 : index
    %0 = vector.load %arg1[%c0, %c0_0] : memref<64x128xf32, #tpu.memory_space<vmem>>, vector<64x128xf32>
    %1 = arith.truncf %0 : vector<64x128xf32> to vector<64x128xbf16>
    %c0_1 = arith.constant 0 : index
    %c0_2 = arith.constant 0 : index
    %2 = vector.load %arg2[%c0_1, %c0_2] : memref<64x128xbf16, #tpu.memory_space<vmem>>, vector<64x128xbf16>
    %3 = arith.mulf %1, %2 : vector<64x128xbf16>
    %cst = arith.constant 0.000000e+00 : f32
    %4 = vector.broadcast %cst : f32 to vector<64x128xf32>
    %5 = arith.maximumf %0, %4 : vector<64x128xf32>
    %6 = arith.truncf %5 : vector<64x128xf32> to vector<64x128xbf16>
    %c0_3 = arith.constant 0 : index
    %c0_4 = arith.constant 0 : index
    %7 = vector.load %arg3[%c0_3, %c0_4] : memref<64x128xbf16, #tpu.memory_space<vmem>>, vector<64x128xbf16>
    %8 = arith.mulf %6, %7 : vector<64x128xbf16>
    %c0_5 = arith.constant 0 : index
    %c0_6 = arith.constant 0 : index
    %9 = vector.load %arg4[%c0_5, %c0_6] : memref<128x128xbf16, #tpu.memory_space<vmem>>, vector<128x128xbf16>
    %cst_7 = arith.constant dense<0.000000e+00> : vector<64x128xf32>
    %10 = tpu.matmul %3, %9, %cst_7 {dimension_numbers = #tpu.dot_dimension_numbers<[1], [0], [0], [1], [0, 0, 1, 1], [], []>} : vector<64x128xbf16>, vector<128x128xbf16>, vector<64x128xf32> -> vector<64x128xf32>
    %c0_8 = arith.constant 0 : index
    %c0_9 = arith.constant 0 : index
    %11 = vector.load %arg5[%c0_8, %c0_9] : memref<128x128xbf16, #tpu.memory_space<vmem>>, vector<128x128xbf16>
    %cst_10 = arith.constant dense<0.000000e+00> : vector<64x128xf32>
    %12 = tpu.matmul %8, %11, %cst_10 {dimension_numbers = #tpu.dot_dimension_numbers<[1], [0], [0], [1], [0, 0, 1, 1], [], []>} : vector<64x128xbf16>, vector<128x128xbf16>, vector<64x128xf32> -> vector<64x128xf32>
    %13 = arith.addf %10, %12 : vector<64x128xf32>
    %c0_11 = arith.constant 0 : index
    %c0_12 = arith.constant 0 : index
    %14 = vector.load %arg6[%c0_11, %c0_12] : memref<1x128xf32, #tpu.memory_space<vmem>>, vector<1x128xf32>
    %15 = vector.broadcast %14 : vector<1x128xf32> to vector<64x128xf32>
    %16 = arith.addf %13, %15 : vector<64x128xf32>
    %c0_13 = arith.constant 0 : index
    %c0_14 = arith.constant 0 : index
    %17 = vector.load %arg7[%c0_13, %c0_14] : memref<64x128xf32, #tpu.memory_space<vmem>>, vector<64x128xf32>
    tpu.vector_store %arg7[%c0_13, %c0_14], %16 {strides = array<i32>} : memref<64x128xf32, #tpu.memory_space<vmem>>, vector<64x128xf32>,
    return
  }
  func.func @transform_0(%arg0: i32) -> (i32, i32) {
    %c0_i32 = arith.constant 0 : i32
    %c0_i32_0 = arith.constant 0 : i32
    return %arg0, %c0_i32 : i32, i32
  }
  func.func @transform_1(%arg0: i32) -> (i32, i32) {
    %c0_i32 = arith.constant 0 : i32
    %c0_i32_0 = arith.constant 0 : i32
    return %arg0, %c0_i32 : i32, i32
  }
  func.func @transform_2(%arg0: i32) -> (i32, i32) {
    %c0_i32 = arith.constant 0 : i32
    %c0_i32_0 = arith.constant 0 : i32
    return %arg0, %c0_i32 : i32, i32
  }
  func.func @transform_3(%arg0: i32) -> (i32, i32) {
    %c0_i32 = arith.constant 0 : i32
    %c0_i32_0 = arith.constant 0 : i32
    %c0_i32_1 = arith.constant 0 : i32
    return %c0_i32, %c0_i32_0 : i32, i32
  }
  func.func @transform_4(%arg0: i32) -> (i32, i32) {
    %c0_i32 = arith.constant 0 : i32
    %c0_i32_0 = arith.constant 0 : i32
    %c0_i32_1 = arith.constant 0 : i32
    return %c0_i32, %c0_i32_0 : i32, i32
  }
  func.func @transform_5(%arg0: i32) -> (i32, i32) {
    %c0_i32 = arith.constant 0 : i32
    %c0_i32_0 = arith.constant 0 : i32
    %c0_i32_1 = arith.constant 0 : i32
    return %c0_i32, %c0_i32_0 : i32, i32
  }
  func.func @transform_6(%arg0: i32) -> (i32, i32) {
    %c0_i32 = arith.constant 0 : i32
    %c0_i32_0 = arith.constant 0 : i32
    return %arg0, %c0_i32 : i32, i32
  }
}

</mosaic_0001>

<llo_original>
// kernel: gcn_sampling_forward.7
$region0: #{gcn_sampling_forward.7}
  #allocation0 [shape = 'u32[]', space=smem, size = 0x4, offset = 0x4, fixed_abs, tag = 'smem constant byte address 0x4 - core index']
  #allocation1 [shape = 'u32[144,128]{1,0:T(1,128)}', space=vmem, size = 0x12000, scoped, tag = 'internal scratch']
  #allocation2 [shape = 's32[1]{0}', space=sflag, size = 0x4, scoped, tag = 'scoped memory for gcn_sampling_forward.7']
  #allocation3 [shape = 'u8[32768]{0}', space=smem, size = 0x8000, scoped, tag = 'prefetched SMEM operand 0']
  %s0 = inlined_call_operand.vmem [shape: s32[64,4], index: 0, kind: input, shape index: {}]
  %s1 = inlined_call_operand.vmem [shape: f32[128,1,128], index: 1, kind: input, shape index: {}, may-alias: {1,2,3,4}]
  %s2 = inlined_call_operand.vmem [shape: f32[128,1,128], index: 2, kind: input, shape index: {}, may-alias: {1,2,3,4}]
  %s3 = inlined_call_operand.vmem [shape: f32[128,1,128], index: 3, kind: input, shape index: {}, may-alias: {1,2,3,4}]
  %s4 = inlined_call_operand.vmem [shape: f32[128,1,128], index: 4, kind: input, shape index: {}, may-alias: {1,2,3,4}]
  %s5 = inlined_call_operand.vmem [shape: f32[64,1,128], index: 5, kind: output, shape index: {}]
  %s6 = sld [smem:[#allocation0]]
  $region49: #{gcn_sampling_forward.7} parent=0
    _
  %s8 = ssub.s32 1, %s6
  %s9 = scalar_select 0, %s8, %s6
  %s10 = sshll.u32 %s0, 4
  %s11 = int_to_ptr.vmem [resolvable:$true] %s10
  %13 = dma.vmem_to_smem %s11, 1024, [#allocation3], [#allocation2]
  %14 = dma.done [#allocation2], 1024
  %15 = sfence
  loop: start=0, step=1, limit=66
  $region2: #{gcn_sampling_forward.7} parent=0 // loop_pre_header
    _
  $region3: #{gcn_sampling_forward.7} parent=0 // loop_header
    %s17 = sphi 0, %s21
    %p18 = scmp.ge.s32.totalorder %s17, 66
    %s31 = sphi 0, %s33
    %s34 = sphi 0, %s31
    %s35 = sphi 0, %s34
    %s51 = sphi 0, %s35
    %s63 = sphi 0, %s65
    %s66 = sphi 0, %s63
    %s67 = sphi 0, %s66
    %s83 = sphi 0, %s67
    %s95 = sphi 0, %s97
    %s98 = sphi 0, %s95
    %s99 = sphi 0, %s98
    %s115 = sphi 0, %s99
    %s127 = sphi 0, %s129
    %s130 = sphi 0, %s127
    %s131 = sphi 0, %s130
    %s147 = sphi 0, %s131
    %s153 = sphi 0, %s155
    %s156 = sphi 0, %s153
    %s157 = sphi 0, %s156
    %s173 = sphi 0, %s157
  $region4: #{gcn_sampling_forward.7} parent=0 // loop_header_branch
    %20 = sbr.rel (%p18) target = $region8
  $region5: #{gcn_sampling_forward.7} parent=0 // loop_body
    %s22 = ssub.s32 %s17, 1
    %s23 = ssub.s32 %s17, 2
    %s24 = sadd.s32 %s17, 1
    %s25 = smul.u32 %s17, 128
    %s26 = sld [smem:[#allocation3 + %s25]]
    %s27 = smul.u32 %s24, 128
    %s28 = sld [smem:[#allocation3 + %s27]]
    %s29 = ssub.s32 %s26, %s28
    %p30 = scmp.eq.s32.totalorder %s29, 0
    %s32 = sadd.s32 %s31, 1
    %s33 = scalar_select %p30, %s31, %s32
    %p36 = pneg %p30
    %p37 = scmp.eq.s32.totalorder %s17, 63
    %p38 = por %p36, %p37
    %p39 = scmp.ne.s32.totalorder %s31, %s34
    %p40 = scmp.eq.s32.totalorder %s17, 0
    %p41 = por %p39, %p40
    %p42 = scmp.ne.s32.totalorder %s31, %s34
    %p43 = scmp.eq.s32.totalorder %s22, 63
    %p44 = por %p42, %p43
    %p45 = scmp.ne.s32.totalorder %s34, %s35
    %p46 = scmp.eq.s32.totalorder %s22, 0
    %p47 = por %p45, %p46
    %p48 = scmp.ne.s32.totalorder %s34, %s35
    %p49 = scmp.eq.s32.totalorder %s23, 63
    %p50 = por %p48, %p49
    %p52 = scmp.ne.s32.totalorder %s35, %s51
    %p53 = scmp.eq.s32.totalorder %s23, 0
    %p54 = por %p52, %p53
    %s55 = smul.u32 %s17, 128
    %s56 = sadd.s32 %s55, 1
    %s57 = sld [smem:[#allocation3 + %s56]]
    %s58 = smul.u32 %s24, 128
    %s59 = sadd.s32 %s58, 1
    %s60 = sld [smem:[#allocation3 + %s59]]
    %s61 = ssub.s32 %s57, %s60
    %p62 = scmp.eq.s32.totalorder %s61, 0
    %s64 = sadd.s32 %s63, 1
    %s65 = scalar_select %p62, %s63, %s64
    %p68 = pneg %p62
    %p69 = scmp.eq.s32.totalorder %s17, 63
    %p70 = por %p68, %p69
    %p71 = scmp.ne.s32.totalorder %s63, %s66
    %p72 = scmp.eq.s32.totalorder %s17, 0
    %p73 = por %p71, %p72
    %p74 = scmp.ne.s32.totalorder %s63, %s66
    %p75 = scmp.eq.s32.totalorder %s22, 63
    %p76 = por %p74, %p75
    %p77 = scmp.ne.s32.totalorder %s66, %s67
    %p78 = scmp.eq.s32.totalorder %s22, 0
    %p79 = por %p77, %p78
    %p80 = scmp.ne.s32.totalorder %s66, %s67
    %p81 = scmp.eq.s32.totalorder %s23, 63
    %p82 = por %p80, %p81
    %p84 = scmp.ne.s32.totalorder %s67, %s83
    %p85 = scmp.eq.s32.totalorder %s23, 0
    %p86 = por %p84, %p85
    %s87 = smul.u32 %s17, 128
    %s88 = sadd.s32 %s87, 2
    %s89 = sld [smem:[#allocation3 + %s88]]
    %s90 = smul.u32 %s24, 128
    %s91 = sadd.s32 %s90, 2
    %s92 = sld [smem:[#allocation3 + %s91]]
    %s93 = ssub.s32 %s89, %s92
    %p94 = scmp.eq.s32.totalorder %s93, 0
    %s96 = sadd.s32 %s95, 1
    %s97 = scalar_select %p94, %s95, %s96
    %p100 = pneg %p94
    %p101 = scmp.eq.s32.totalorder %s17, 63
    %p102 = por %p100, %p101
    %p103 = scmp.ne.s32.totalorder %s95, %s98
    %p104 = scmp.eq.s32.totalorder %s17, 0
    %p105 = por %p103, %p104
    %p106 = scmp.ne.s32.totalorder %s95, %s98
    %p107 = scmp.eq.s32.totalorder %s22, 63
    %p108 = por %p106, %p107
    %p109 = scmp.ne.s32.totalorder %s98, %s99
    %p110 = scmp.eq.s32.totalorder %s22, 0
    %p111 = por %p109, %p110
    %p112 = scmp.ne.s32.totalorder %s98, %s99
    %p113 = scmp.eq.s32.totalorder %s23, 63
    %p114 = por %p112, %p113
    %p116 = scmp.ne.s32.totalorder %s99, %s115
    %p117 = scmp.eq.s32.totalorder %s23, 0
    %p118 = por %p116, %p117
    %s119 = smul.u32 %s17, 128
    %s120 = sadd.s32 %s119, 3
    %s121 = sld [smem:[#allocation3 + %s120]]
    %s122 = smul.u32 %s24, 128
    %s123 = sadd.s32 %s122, 3
    %s124 = sld [smem:[#allocation3 + %s123]]
    %s125 = ssub.s32 %s121, %s124
    %p126 = scmp.eq.s32.totalorder %s125, 0
    %s128 = sadd.s32 %s127, 1
    %s129 = scalar_select %p126, %s127, %s128
    %p132 = pneg %p126
    %p133 = scmp.eq.s32.totalorder %s17, 63
    %p134 = por %p132, %p133
    %p135 = scmp.ne.s32.totalorder %s127, %s130
    %p136 = scmp.eq.s32.totalorder %s17, 0
    %p137 = por %p135, %p136
    %p138 = scmp.ne.s32.totalorder %s127, %s130
    %p139 = scmp.eq.s32.totalorder %s22, 63
    %p140 = por %p138, %p139
    %p141 = scmp.ne.s32.totalorder %s130, %s131
    %p142 = scmp.eq.s32.totalorder %s22, 0
    %p143 = por %p141, %p142
    %p144 = scmp.ne.s32.totalorder %s130, %s131
    %p145 = scmp.eq.s32.totalorder %s23, 63
    %p146 = por %p144, %p145
    %p148 = scmp.ne.s32.totalorder %s131, %s147
    %p149 = scmp.eq.s32.totalorder %s23, 0
    %p150 = por %p148, %p149
    %s151 = ssub.s32 %s17, %s24
    %p152 = scmp.eq.s32.totalorder %s151, 0
    %s154 = sadd.s32 %s153, 1
    %s155 = scalar_select %p152, %s153, %s154
    %p158 = pneg %p152
    %p159 = scmp.eq.s32.totalorder %s17, 63
    %p160 = por %p158, %p159
    %p161 = scmp.ne.s32.totalorder %s153, %s156
    %p162 = scmp.eq.s32.totalorder %s17, 0
    %p163 = por %p161, %p162
    %p164 = scmp.ne.s32.totalorder %s153, %s156
    %p165 = scmp.eq.s32.totalorder %s22, 63
    %p166 = por %p164, %p165
    %p167 = scmp.ne.s32.totalorder %s156, %s157
    %p168 = scmp.eq.s32.totalorder %s22, 0
    %p169 = por %p167, %p168
    %p170 = scmp.ne.s32.totalorder %s156, %s157
    %p171 = scmp.eq.s32.totalorder %s23, 63
    %p172 = por %p170, %p171
    %p174 = scmp.ne.s32.totalorder %s157, %s173
    %p175 = scmp.eq.s32.totalorder %s23, 0
    %p176 = por %p174, %p175
    %p177 = scmp.le.s32.totalorder 1, %s17
    %p178 = scmp.lt.s32.totalorder %s17, 65
    %p179 = pnand %p177, %p178
    %p180 = pneg %p179
    // Predicated region
    $region9: #{gcn_sampling_forward.7} parent=5 // pred_check
      _
    $region10: #{gcn_sampling_forward.7} parent=5 // pred_check_branch
      %182 = sbr.rel (%p179) target = $region12
    $region11: #{gcn_sampling_forward.7} parent=5 // pred_region
      %s183 = ssub.s32 %s17, 1
    $region12: #{gcn_sampling_forward.7} parent=5 // pred_fallthru
      _
    %p184 = scmp.lt.s32.totalorder %s17, 64
    // Predicated region
    $region13: #{gcn_sampling_forward.7} parent=5 // pred_check
      %p185 = pneg %p184
    $region14: #{gcn_sampling_forward.7} parent=5 // pred_check_branch
      %187 = sbr.rel (%p185) target = $region16
    $region15: #{gcn_sampling_forward.7} parent=5 // pred_region
      // Predicated region
      $region17: #{gcn_sampling_forward.7} parent=15 // pred_check
        %p188 = pneg %p41
      $region18: #{gcn_sampling_forward.7} parent=15 // pred_check_branch
        %190 = sbr.rel (%p188) target = $region20
      $region19: #{gcn_sampling_forward.7} parent=15 // pred_region
        %s191 = smul.u32 %s17, 128
        %s192 = sld [smem:[#allocation3 + %s191]]
        %p193 = scmp.lt.s32.totalorder %s192, 127
        %s194 = scalar_select %p193, %s192, 127
        %s195 = scalar_lea.vmem %s1, %s194
        %s196 = smul.u32 %s17, 128
        %s197 = sld [smem:[#allocation3 + %s196]]
      $region20: #{gcn_sampling_forward.7} parent=15 // pred_fallthru
        _
      // Predicated region
      $region21: #{gcn_sampling_forward.7} parent=15 // pred_check
        %p198 = pneg %p73
      $region22: #{gcn_sampling_forward.7} parent=15 // pred_check_branch
        %200 = sbr.rel (%p198) target = $region24
      $region23: #{gcn_sampling_forward.7} parent=15 // pred_region
        %s201 = smul.u32 %s17, 128
        %s202 = sadd.s32 %s201, 1
        %s203 = sld [smem:[#allocation3 + %s202]]
        %p204 = scmp.lt.s32.totalorder %s203, 127
        %s205 = scalar_select %p204, %s203, 127
        %s206 = scalar_lea.vmem %s2, %s205
        %s207 = smul.u32 %s17, 128
        %s208 = sadd.s32 %s207, 1
        %s209 = sld [smem:[#allocation3 + %s208]]
      $region24: #{gcn_sampling_forward.7} parent=15 // pred_fallthru
        _
      // Predicated region
      $region25: #{gcn_sampling_forward.7} parent=15 // pred_check
        %p210 = pneg %p105
      $region26: #{gcn_sampling_forward.7} parent=15 // pred_check_branch
        %212 = sbr.rel (%p210) target = $region28
      $region27: #{gcn_sampling_forward.7} parent=15 // pred_region
        %s213 = smul.u32 %s17, 128
        %s214 = sadd.s32 %s213, 2
        %s215 = sld [smem:[#allocation3 + %s214]]
        %p216 = scmp.lt.s32.totalorder %s215, 127
        %s217 = scalar_select %p216, %s215, 127
        %s218 = scalar_lea.vmem %s3, %s217
        %s219 = smul.u32 %s17, 128
        %s220 = sadd.s32 %s219, 2
        %s221 = sld [smem:[#allocation3 + %s220]]
      $region28: #{gcn_sampling_forward.7} parent=15 // pred_fallthru
        _
      // Predicated region
      $region29: #{gcn_sampling_forward.7} parent=15 // pred_check
        %p222 = pneg %p137
      $region30: #{gcn_sampling_forward.7} parent=15 // pred_check_branch
        %224 = sbr.rel (%p222) target = $region32
      $region31: #{gcn_sampling_forward.7} parent=15 // pred_region
        %s225 = smul.u32 %s17, 128
        %s226 = sadd.s32 %s225, 3
        %s227 = sld [smem:[#allocation3 + %s226]]
        %p228 = scmp.lt.s32.totalorder %s227, 127
        %s229 = scalar_select %p228, %s227, 127
        %s230 = scalar_lea.vmem %s4, %s229
        %s231 = smul.u32 %s17, 128
        %s232 = sadd.s32 %s231, 3
        %s233 = sld [smem:[#allocation3 + %s232]]
      $region32: #{gcn_sampling_forward.7} parent=15 // pred_fallthru
        _
    $region16: #{gcn_sampling_forward.7} parent=5 // pred_fallthru
      _
    %p234 = scmp.le.s32.totalorder 1, %s17
    %p235 = scmp.lt.s32.totalorder %s17, 65
    %p236 = pnand %p234, %p235
    %p237 = pneg %p236
    // Predicated region
    $region33: #{gcn_sampling_forward.7} parent=5 // pred_check
      _
    $region34: #{gcn_sampling_forward.7} parent=5 // pred_check_branch
      %239 = sbr.rel (%p236) target = $region36
    $region35: #{gcn_sampling_forward.7} parent=5 // pred_region
      %s240 = ssub.s32 %s17, 1
      %s241 = smul.u32 %s22, 128
      %s242 = sld [smem:[#allocation3 + %s241]]
      %p243 = scmp.lt.s32.totalorder %s242, 127
      %s244 = scalar_select %p243, %s242, 127
      %s245 = scalar_lea.vmem %s1, %s244
      %p246 = pneg %p47
      %p247 = pneg %p44
      %s248 = smul.u32 %s22, 128
      %s249 = sadd.s32 %s248, 1
      %s250 = sld [smem:[#allocation3 + %s249]]
      %p251 = scmp.lt.s32.totalorder %s250, 127
      %s252 = scalar_select %p251, %s250, 127
      %s253 = scalar_lea.vmem %s2, %s252
      %p254 = pneg %p79
      %p255 = pneg %p76
      %s256 = smul.u32 %s22, 128
      %s257 = sadd.s32 %s256, 2
      %s258 = sld [smem:[#allocation3 + %s257]]
      %p259 = scmp.lt.s32.totalorder %s258, 127
      %s260 = scalar_select %p259, %s258, 127
      %s261 = scalar_lea.vmem %s3, %s260
      %p262 = pneg %p111
      %p263 = pneg %p108
      %s264 = smul.u32 %s22, 128
      %s265 = sadd.s32 %s264, 3
      %s266 = sld [smem:[#allocation3 + %s265]]
      %p267 = scmp.lt.s32.totalorder %s266, 127
      %s268 = scalar_select %p267, %s266, 127
      %s269 = scalar_lea.vmem %s4, %s268
      %p270 = pneg %p143
      %p271 = pneg %p140
      %p272 = pneg %p169
      %p273 = pneg %p166
      %p274 = scmp.lt.s32.totalorder %s22, 63
      %s275 = scalar_select %p274, %s22, 63
      %s276 = scalar_lea.vmem %s5, %s275
      %s277 = smul.u32 %s22, 128
      %s278 = sld [smem:[#allocation3 + %s277]]
      %p279 = scmp.lt.s32.totalorder %s278, 127
      %s280 = scalar_select %p279, %s278, 127
      %s281 = scalar_lea.vmem %s1, %s280
      %s282 = smul.u32 %s22, 128
      %s283 = sld [smem:[#allocation3 + %s282]]
      %s284 = smul.u32 %s22, 128
      %s285 = sadd.s32 %s284, 1
      %s286 = sld [smem:[#allocation3 + %s285]]
      %p287 = scmp.lt.s32.totalorder %s286, 127
      %s288 = scalar_select %p287, %s286, 127
      %s289 = scalar_lea.vmem %s2, %s288
      %s290 = smul.u32 %s22, 128
      %s291 = sadd.s32 %s290, 1
      %s292 = sld [smem:[#allocation3 + %s291]]
      %s293 = smul.u32 %s22, 128
      %s294 = sadd.s32 %s293, 2
      %s295 = sld [smem:[#allocation3 + %s294]]
      %p296 = scmp.lt.s32.totalorder %s295, 127
      %s297 = scalar_select %p296, %s295, 127
      %s298 = scalar_lea.vmem %s3, %s297
      %s299 = smul.u32 %s22, 128
      %s300 = sadd.s32 %s299, 2
      %s301 = sld [smem:[#allocation3 + %s300]]
      %s302 = smul.u32 %s22, 128
      %s303 = sadd.s32 %s302, 3
      %s304 = sld [smem:[#allocation3 + %s303]]
      %p305 = scmp.lt.s32.totalorder %s304, 127
      %s306 = scalar_select %p305, %s304, 127
      %s307 = scalar_lea.vmem %s4, %s306
      %s308 = smul.u32 %s22, 128
      %s309 = sadd.s32 %s308, 3
      %s310 = sld [smem:[#allocation3 + %s309]]
      %p311 = scmp.lt.s32.totalorder %s22, 63
      %s312 = scalar_select %p311, %s22, 63
      %s313 = scalar_lea.vmem %s5, %s312
      %v314 = vld [vmem:[%s281] sm:$0x1]
      %v315 = vld [vmem:[%s289] sm:$0x1]
      %v316 = vadd.f32 %v314, %v315
      %v317 = vld [vmem:[%s298] sm:$0x1]
      %v318 = vadd.f32 %v316, %v317
      %v319 = vld [vmem:[%s307] sm:$0x1]
      %v320 = vadd.f32 %v318, %v319
      %v321 = vmul.f32 %v320, 0.25
      %322 = vst [vmem:[%s313] sm:$0x1] %v321
      %p323 = scmp.lt.s32.totalorder %s22, 63
      %s324 = scalar_select %p323, %s22, 63
      %s325 = scalar_lea.vmem %s5, %s324
      // Predicated region
      $region37: #{gcn_sampling_forward.7} parent=35 // pred_check
        %p326 = pneg %p166
      $region38: #{gcn_sampling_forward.7} parent=35 // pred_check_branch
        %328 = sbr.rel (%p326) target = $region40
      $region39: #{gcn_sampling_forward.7} parent=35 // pred_region
        _
      $region40: #{gcn_sampling_forward.7} parent=35 // pred_fallthru
        _
    $region36: #{gcn_sampling_forward.7} parent=5 // pred_fallthru
      _
    %p329 = scmp.le.s32.totalorder 2, %s17
    // Predicated region
    $region41: #{gcn_sampling_forward.7} parent=5 // pred_check
      %p330 = pneg %p329
    $region42: #{gcn_sampling_forward.7} parent=5 // pred_check_branch
      %332 = sbr.rel (%p330) target = $region44
    $region43: #{gcn_sampling_forward.7} parent=5 // pred_region
      %s333 = ssub.s32 %s17, 2
      // Predicated region
      $region45: #{gcn_sampling_forward.7} parent=43 // pred_check
        %p334 = pneg %p172
      $region46: #{gcn_sampling_forward.7} parent=43 // pred_check_branch
        %336 = sbr.rel (%p334) target = $region48
      $region47: #{gcn_sampling_forward.7} parent=43 // pred_region
        %p337 = scmp.lt.s32.totalorder %s23, 63
        %s338 = scalar_select %p337, %s23, 63
        %s339 = scalar_lea.vmem %s5, %s338
      $region48: #{gcn_sampling_forward.7} parent=43 // pred_fallthru
        _
    $region44: #{gcn_sampling_forward.7} parent=5 // pred_fallthru
      _
  $region6: #{gcn_sampling_forward.7} parent=0 // loop_footer
    %s21 = sadd.s32 1, %s17
  $region7: #{gcn_sampling_forward.7} parent=0 // loop_footer_branch
    %16 = sbr.rel target = $region3
  $region8: #{gcn_sampling_forward.7} parent=0 // loop_exit
    _

// kernel: gcn_sampling_forward.6
$region0: #{gcn_sampling_forward.6}
  #allocation0 [shape = 'u32[]', space=smem, size = 0x4, offset = 0x4, fixed_abs, tag = 'smem constant byte address 0x4 - core index']
  #allocation1 [shape = 'u32[144,128]{1,0:T(1,128)}', space=vmem, size = 0x12000, scoped, tag = 'internal scratch']
  %s0 = inlined_call_operand.vmem [shape: bf16[128,256], index: 0, kind: input, shape index: {}]
  %s1 = inlined_call_operand.vmem [shape: bf16[128,256], index: 1, kind: input, shape index: {}]
  %s2 = inlined_call_operand.vmem [shape: bf16[256,128], index: 2, kind: input, shape index: {}]
  %s3 = inlined_call_operand.vmem [shape: f32[1,128], index: 3, kind: input, shape index: {}]
  %s4 = inlined_call_operand.vmem [shape: f32[128,128], index: 4, kind: output, shape index: {}]
  %s5 = sld [smem:[#allocation0]]
  $region49: #{gcn_sampling_forward.6} parent=0
    _
  %s7 = ssub.s32 1, %s5
  %s8 = scalar_select 0, %s7, %s5
  loop: start=0, step=1, limit=4
  $region2: #{gcn_sampling_forward.6} parent=0 // loop_pre_header
    _
  $region3: #{gcn_sampling_forward.6} parent=0 // loop_header
    %s10 = sphi 0, %s14
    %p11 = scmp.ge.s32.totalorder %s10, 4
    %s20 = sphi 0, %s22
    %s23 = sphi 0, %s20
    %s24 = sphi 0, %s23
    %s40 = sphi 0, %s24
    %s46 = sphi 0, %s48
    %s49 = sphi 0, %s46
    %s50 = sphi 0, %s49
    %s66 = sphi 0, %s50
    %s70 = sphi 0, %s70
    %s72 = sphi 0, %s70
    %s73 = sphi 0, %s72
    %s87 = sphi 0, %s73
    %s91 = sphi 0, %s91
    %s93 = sphi 0, %s91
    %s94 = sphi 0, %s93
    %s108 = sphi 0, %s94
    %s114 = sphi 0, %s116
    %s117 = sphi 0, %s114
    %s118 = sphi 0, %s117
    %s134 = sphi 0, %s118
  $region4: #{gcn_sampling_forward.6} parent=0 // loop_header_branch
    %13 = sbr.rel (%p11) target = $region8
  $region5: #{gcn_sampling_forward.6} parent=0 // loop_body
    %s15 = ssub.s32 %s10, 1
    %s16 = ssub.s32 %s10, 2
    %s17 = sadd.s32 %s10, 1
    %s18 = ssub.s32 %s10, %s17
    %p19 = scmp.eq.s32.totalorder %s18, 0
    %s21 = sadd.s32 %s20, 1
    %s22 = scalar_select %p19, %s20, %s21
    %p25 = pneg %p19
    %p26 = scmp.eq.s32.totalorder %s10, 1
    %p27 = por %p25, %p26
    %p28 = scmp.ne.s32.totalorder %s20, %s23
    %p29 = scmp.eq.s32.totalorder %s10, 0
    %p30 = por %p28, %p29
    %p31 = scmp.ne.s32.totalorder %s20, %s23
    %p32 = scmp.eq.s32.totalorder %s15, 1
    %p33 = por %p31, %p32
    %p34 = scmp.ne.s32.totalorder %s23, %s24
    %p35 = scmp.eq.s32.totalorder %s15, 0
    %p36 = por %p34, %p35
    %p37 = scmp.ne.s32.totalorder %s23, %s24
    %p38 = scmp.eq.s32.totalorder %s16, 1
    %p39 = por %p37, %p38
    %p41 = scmp.ne.s32.totalorder %s24, %s40
    %p42 = scmp.eq.s32.totalorder %s16, 0
    %p43 = por %p41, %p42
    %s44 = ssub.s32 %s10, %s17
    %p45 = scmp.eq.s32.totalorder %s44, 0
    %s47 = sadd.s32 %s46, 1
    %s48 = scalar_select %p45, %s46, %s47
    %p51 = pneg %p45
    %p52 = scmp.eq.s32.totalorder %s10, 1
    %p53 = por %p51, %p52
    %p54 = scmp.ne.s32.totalorder %s46, %s49
    %p55 = scmp.eq.s32.totalorder %s10, 0
    %p56 = por %p54, %p55
    %p57 = scmp.ne.s32.totalorder %s46, %s49
    %p58 = scmp.eq.s32.totalorder %s15, 1
    %p59 = por %p57, %p58
    %p60 = scmp.ne.s32.totalorder %s49, %s50
    %p61 = scmp.eq.s32.totalorder %s15, 0
    %p62 = por %p60, %p61
    %p63 = scmp.ne.s32.totalorder %s49, %s50
    %p64 = scmp.eq.s32.totalorder %s16, 1
    %p65 = por %p63, %p64
    %p67 = scmp.ne.s32.totalorder %s50, %s66
    %p68 = scmp.eq.s32.totalorder %s16, 0
    %p69 = por %p67, %p68
    %s71 = sadd.s32 %s70, 1
    %p74 = scmp.eq.s32.totalorder %s10, 1
    %p75 = scmp.ne.s32.totalorder %s70, %s72
    %p76 = scmp.eq.s32.totalorder %s10, 0
    %p77 = por %p75, %p76
    %p78 = scmp.ne.s32.totalorder %s70, %s72
    %p79 = scmp.eq.s32.totalorder %s15, 1
    %p80 = por %p78, %p79
    %p81 = scmp.ne.s32.totalorder %s72, %s73
    %p82 = scmp.eq.s32.totalorder %s15, 0
    %p83 = por %p81, %p82
    %p84 = scmp.ne.s32.totalorder %s72, %s73
    %p85 = scmp.eq.s32.totalorder %s16, 1
    %p86 = por %p84, %p85
    %p88 = scmp.ne.s32.totalorder %s73, %s87
    %p89 = scmp.eq.s32.totalorder %s16, 0
    %p90 = por %p88, %p89
    %s92 = sadd.s32 %s91, 1
    %p95 = scmp.eq.s32.totalorder %s10, 1
    %p96 = scmp.ne.s32.totalorder %s91, %s93
    %p97 = scmp.eq.s32.totalorder %s10, 0
    %p98 = por %p96, %p97
    %p99 = scmp.ne.s32.totalorder %s91, %s93
    %p100 = scmp.eq.s32.totalorder %s15, 1
    %p101 = por %p99, %p100
    %p102 = scmp.ne.s32.totalorder %s93, %s94
    %p103 = scmp.eq.s32.totalorder %s15, 0
    %p104 = por %p102, %p103
    %p105 = scmp.ne.s32.totalorder %s93, %s94
    %p106 = scmp.eq.s32.totalorder %s16, 1
    %p107 = por %p105, %p106
    %p109 = scmp.ne.s32.totalorder %s94, %s108
    %p110 = scmp.eq.s32.totalorder %s16, 0
    %p111 = por %p109, %p110
    %s112 = ssub.s32 %s10, %s17
    %p113 = scmp.eq.s32.totalorder %s112, 0
    %s115 = sadd.s32 %s114, 1
    %s116 = scalar_select %p113, %s114, %s115
    %p119 = pneg %p113
    %p120 = scmp.eq.s32.totalorder %s10, 1
    %p121 = por %p119, %p120
    %p122 = scmp.ne.s32.totalorder %s114, %s117
    %p123 = scmp.eq.s32.totalorder %s10, 0
    %p124 = por %p122, %p123
    %p125 = scmp.ne.s32.totalorder %s114, %s117
    %p126 = scmp.eq.s32.totalorder %s15, 1
    %p127 = por %p125, %p126
    %p128 = scmp.ne.s32.totalorder %s117, %s118
    %p129 = scmp.eq.s32.totalorder %s15, 0
    %p130 = por %p128, %p129
    %p131 = scmp.ne.s32.totalorder %s117, %s118
    %p132 = scmp.eq.s32.totalorder %s16, 1
    %p133 = por %p131, %p132
    %p135 = scmp.ne.s32.totalorder %s118, %s134
    %p136 = scmp.eq.s32.totalorder %s16, 0
    %p137 = por %p135, %p136
    %p138 = scmp.le.s32.totalorder 1, %s10
    %p139 = scmp.lt.s32.totalorder %s10, 3
    %p140 = pnand %p138, %p139
    %p141 = pneg %p140
    // Predicated region
    $region9: #{gcn_sampling_forward.6} parent=5 // pred_check
      _
    $region10: #{gcn_sampling_forward.6} parent=5 // pred_check_branch
      %143 = sbr.rel (%p140) target = $region12
    $region11: #{gcn_sampling_forward.6} parent=5 // pred_region
      %s144 = ssub.s32 %s10, 1
      // Predicated region
      $region13: #{gcn_sampling_forward.6} parent=11 // pred_check
        %p145 = pneg %p83
      $region14: #{gcn_sampling_forward.6} parent=11 // pred_check_branch
        %147 = sbr.rel (%p145) target = $region16
      $region15: #{gcn_sampling_forward.6} parent=11 // pred_region
        _
      $region16: #{gcn_sampling_forward.6} parent=11 // pred_fallthru
        _
      // Predicated region
      $region17: #{gcn_sampling_forward.6} parent=11 // pred_check
        %p148 = pneg %p104
      $region18: #{gcn_sampling_forward.6} parent=11 // pred_check_branch
        %150 = sbr.rel (%p148) target = $region20
      $region19: #{gcn_sampling_forward.6} parent=11 // pred_region
        _
      $region20: #{gcn_sampling_forward.6} parent=11 // pred_fallthru
        _
    $region12: #{gcn_sampling_forward.6} parent=5 // pred_fallthru
      _
    %p151 = scmp.lt.s32.totalorder %s10, 2
    // Predicated region
    $region21: #{gcn_sampling_forward.6} parent=5 // pred_check
      %p152 = pneg %p151
    $region22: #{gcn_sampling_forward.6} parent=5 // pred_check_branch
      %154 = sbr.rel (%p152) target = $region24
    $region23: #{gcn_sampling_forward.6} parent=5 // pred_region
      // Predicated region
      $region25: #{gcn_sampling_forward.6} parent=23 // pred_check
        %p155 = pneg %p30
      $region26: #{gcn_sampling_forward.6} parent=23 // pred_check_branch
        %157 = sbr.rel (%p155) target = $region28
      $region27: #{gcn_sampling_forward.6} parent=23 // pred_region
        %s158 = smul.u32 8, %s10
        %p159 = scmp.lt.s32.totalorder %s158, 15
        %s160 = scalar_select %p159, %s158, 15
        %s161 = smul.addr %s160, 2
        %s162 = smul.addr %s161, 4
        %s163 = scalar_lea.vmem %s0, %s162
        %s164 = smul.u32 8, %s10
      $region28: #{gcn_sampling_forward.6} parent=23 // pred_fallthru
        _
      // Predicated region
      $region29: #{gcn_sampling_forward.6} parent=23 // pred_check
        %p165 = pneg %p56
      $region30: #{gcn_sampling_forward.6} parent=23 // pred_check_branch
        %167 = sbr.rel (%p165) target = $region32
      $region31: #{gcn_sampling_forward.6} parent=23 // pred_region
        %s168 = smul.u32 8, %s10
        %p169 = scmp.lt.s32.totalorder %s168, 15
        %s170 = scalar_select %p169, %s168, 15
        %s171 = smul.addr %s170, 2
        %s172 = smul.addr %s171, 4
        %s173 = scalar_lea.vmem %s1, %s172
        %s174 = smul.u32 8, %s10
      $region32: #{gcn_sampling_forward.6} parent=23 // pred_fallthru
        _
    $region24: #{gcn_sampling_forward.6} parent=5 // pred_fallthru
      _
    %p175 = scmp.le.s32.totalorder 1, %s10
    %p176 = scmp.lt.s32.totalorder %s10, 3
    %p177 = pnand %p175, %p176
    %p178 = pneg %p177
    // Predicated region
    $region33: #{gcn_sampling_forward.6} parent=5 // pred_check
      _
    $region34: #{gcn_sampling_forward.6} parent=5 // pred_check_branch
      %180 = sbr.rel (%p177) target = $region36
    $region35: #{gcn_sampling_forward.6} parent=5 // pred_region
      %s181 = ssub.s32 %s10, 1
      %s182 = smul.u32 8, %s15
      %p183 = scmp.lt.s32.totalorder %s182, 15
      %s184 = scalar_select %p183, %s182, 15
      %s185 = smul.addr %s184, 2
      %s186 = smul.addr %s185, 4
      %s187 = scalar_lea.vmem %s0, %s186
      %p188 = pneg %p36
      %p189 = pneg %p33
      %s190 = smul.u32 8, %s15
      %p191 = scmp.lt.s32.totalorder %s190, 15
      %s192 = scalar_select %p191, %s190, 15
      %s193 = smul.addr %s192, 2
      %s194 = smul.addr %s193, 4
      %s195 = scalar_lea.vmem %s1, %s194
      %p196 = pneg %p62
      %p197 = pneg %p59
      %p198 = pneg %p83
      %p199 = pneg %p80
      %p200 = pneg %p104
      %p201 = pneg %p101
      %p202 = pneg %p130
      %p203 = pneg %p127
      %s204 = smul.u32 8, %s15
      %p205 = scmp.lt.s32.totalorder %s204, 15
      %s206 = scalar_select %p205, %s204, 15
      %s207 = smul.addr %s206, 8
      %s208 = scalar_lea.vmem %s4, %s207
      %s209 = smul.u32 8, %s15
      %p210 = scmp.lt.s32.totalorder %s209, 15
      %s211 = scalar_select %p210, %s209, 15
      %s212 = smul.addr %s211, 2
      %s213 = smul.addr %s212, 4
      %s214 = scalar_lea.vmem %s0, %s213
      %s215 = smul.u32 8, %s15
      %s216 = smul.u32 8, %s15
      %p217 = scmp.lt.s32.totalorder %s216, 15
      %s218 = scalar_select %p217, %s216, 15
      %s219 = smul.addr %s218, 2
      %s220 = smul.addr %s219, 4
      %s221 = scalar_lea.vmem %s1, %s220
      %s222 = smul.u32 8, %s15
      %s223 = smul.u32 8, %s15
      %p224 = scmp.lt.s32.totalorder %s223, 15
      %s225 = scalar_select %p224, %s223, 15
      %s226 = smul.addr %s225, 8
      %s227 = scalar_lea.vmem %s4, %s226
      %s228 = smul.u32 8, %s15
      %v230 = vld [vmem:[%s214] sm:$0xff]
      %v231 = vld [vmem:[%s214 + $0x8] sm:$0xff]
      %v232 = vld [vmem:[%s214 + $0x10] sm:$0xff]
      %v233 = vld [vmem:[%s214 + $0x18] sm:$0xff]
      %v234 = vld [vmem:[%s214 + $0x20] sm:$0xff]
      %v235 = vld [vmem:[%s214 + $0x28] sm:$0xff]
      %v236 = vld [vmem:[%s214 + $0x30] sm:$0xff]
      %v237 = vld [vmem:[%s214 + $0x38] sm:$0xff]
      %v238 = vld [vmem:[%s221] sm:$0xff]
      %v239 = vld [vmem:[%s221 + $0x8] sm:$0xff]
      %v240 = vld [vmem:[%s221 + $0x10] sm:$0xff]
      %v241 = vld [vmem:[%s221 + $0x18] sm:$0xff]
      %v242 = vld [vmem:[%s221 + $0x20] sm:$0xff]
      %v243 = vld [vmem:[%s221 + $0x28] sm:$0xff]
      %v244 = vld [vmem:[%s221 + $0x30] sm:$0xff]
      %v245 = vld [vmem:[%s221 + $0x38] sm:$0xff]
      %v246 = vmul.bf16 %v230, %v238
      %v247 = vmul.bf16 %v231, %v239
      %v248 = vmul.bf16 %v232, %v240
      %v249 = vmul.bf16 %v233, %v241
      %v250 = vmul.bf16 %v234, %v242
      %v251 = vmul.bf16 %v235, %v243
      %v252 = vmul.bf16 %v236, %v244
      %v253 = vmul.bf16 %v237, %v245
      %v254 = vld [vmem:[%s2] sm:$0xf]
      %v255 = vld [vmem:[%s2 + $0x4] sm:$0xf]
      %v256 = vld [vmem:[%s2 + $0x8] sm:$0xf]
      %v257 = vld [vmem:[%s2 + $0xc] sm:$0xf]
      %v258 = vld [vmem:[%s2 + $0x10] sm:$0xf]
      %v259 = vld [vmem:[%s2 + $0x14] sm:$0xf]
      %v260 = vld [vmem:[%s2 + $0x18] sm:$0xf]
      %v261 = vld [vmem:[%s2 + $0x1c] sm:$0xf]
      %v262 = vld [vmem:[%s2 + $0x20] sm:$0xf]
      %v263 = vld [vmem:[%s2 + $0x24] sm:$0xf]
      %v264 = vld [vmem:[%s2 + $0x28] sm:$0xf]
      %v265 = vld [vmem:[%s2 + $0x2c] sm:$0xf]
      %v266 = vld [vmem:[%s2 + $0x30] sm:$0xf]
      %v267 = vld [vmem:[%s2 + $0x34] sm:$0xf]
      %v268 = vld [vmem:[%s2 + $0x38] sm:$0xf]
      %v269 = vld [vmem:[%s2 + $0x3c] sm:$0xf]
      %v270 = vld [vmem:[%s2 + $0x40] sm:$0xf]
      %v271 = vld [vmem:[%s2 + $0x44] sm:$0xf]
      %v272 = vld [vmem:[%s2 + $0x48] sm:$0xf]
      %v273 = vld [vmem:[%s2 + $0x4c] sm:$0xf]
      %v274 = vld [vmem:[%s2 + $0x50] sm:$0xf]
      %v275 = vld [vmem:[%s2 + $0x54] sm:$0xf]
      %v276 = vld [vmem:[%s2 + $0x58] sm:$0xf]
      %v277 = vld [vmem:[%s2 + $0x5c] sm:$0xf]
      %v278 = vld [vmem:[%s2 + $0x60] sm:$0xf]
      %v279 = vld [vmem:[%s2 + $0x64] sm:$0xf]
      %v280 = vld [vmem:[%s2 + $0x68] sm:$0xf]
      %v281 = vld [vmem:[%s2 + $0x6c] sm:$0xf]
      %v282 = vld [vmem:[%s2 + $0x70] sm:$0xf]
      %v283 = vld [vmem:[%s2 + $0x74] sm:$0xf]
      %v284 = vld [vmem:[%s2 + $0x78] sm:$0xf]
      %v285 = vld [vmem:[%s2 + $0x7c] sm:$0xf]
      %v286 = vld [vmem:[%s3] sm:$0x1]
      %v288 = vlaneseq
      %v289 = vshrl.u32 %v288, 7
      %v290 = vsub.s32 0, %v289
      %v291 = vrot.slane %v286, %v290
      %v301 = vunpack.c.l.b16 %v246
      %v302 = vunpack.c.h.b16 %v246
      %v303 = vunpack.c.l.b16 %v247
      %v304 = vunpack.c.h.b16 %v247
      %v305 = vunpack.c.l.b16 %v248
      %v306 = vunpack.c.h.b16 %v248
      %v307 = vunpack.c.l.b16 %v249
      %v308 = vunpack.c.h.b16 %v249
      %v309 = vunpack.c.l.b16 %v250
      %v310 = vunpack.c.h.b16 %v250
      %v311 = vunpack.c.l.b16 %v251
      %v312 = vunpack.c.h.b16 %v251
      %v313 = vunpack.c.l.b16 %v252
      %v314 = vunpack.c.h.b16 %v252
      %v315 = vunpack.c.l.b16 %v253
      %v316 = vunpack.c.h.b16 %v253
      %v317 = vpack.c.b16 %v303, %v301
      %v318 = vpack.c.b16 %v304, %v302
      %v319 = vpack.c.b16 %v307, %v305
      %v320 = vpack.c.b16 %v308, %v306
      %v321 = vpack.c.b16 %v311, %v309
      %v322 = vpack.c.b16 %v312, %v310
      %v323 = vpack.c.b16 %v315, %v313
      %v324 = vpack.c.b16 %v316, %v314
      %v365 = vunpack.c.l.b16 %v254
      %v366 = vunpack.c.l.b16 %v255
      %v367 = vunpack.c.l.b16 %v256
      %v368 = vunpack.c.l.b16 %v257
      %v369 = vunpack.c.l.b16 %v258
      %v370 = vunpack.c.l.b16 %v259
      %v371 = vunpack.c.l.b16 %v260
      %v372 = vunpack.c.l.b16 %v261
      %v373 = vunpack.c.l.b16 %v262
      %v374 = vunpack.c.l.b16 %v263
      %v375 = vunpack.c.l.b16 %v264
      %v376 = vunpack.c.l.b16 %v265
      %v377 = vunpack.c.l.b16 %v266
      %v378 = vunpack.c.l.b16 %v267
      %v379 = vunpack.c.l.b16 %v268
      %v380 = vunpack.c.l.b16 %v269
      %v381 = vunpack.c.l.b16 %v270
      %v382 = vunpack.c.l.b16 %v271
      %v383 = vunpack.c.l.b16 %v272
      %v384 = vunpack.c.l.b16 %v273
      %v385 = vunpack.c.l.b16 %v274
      %v386 = vunpack.c.l.b16 %v275
      %v387 = vunpack.c.l.b16 %v276
      %v388 = vunpack.c.l.b16 %v277
      %v389 = vunpack.c.l.b16 %v278
      %v390 = vunpack.c.l.b16 %v279
      %v391 = vunpack.c.l.b16 %v280
      %v392 = vunpack.c.l.b16 %v281
      %v393 = vunpack.c.l.b16 %v282
      %v394 = vunpack.c.l.b16 %v283
      %v395 = vunpack.c.l.b16 %v284
      %v396 = vunpack.c.l.b16 %v285
      %v397 = vpack.c.b16 %v366, %v365
      %v398 = vpack.c.b16 %v368, %v367
      %v399 = vpack.c.b16 %v370, %v369
      %v400 = vpack.c.b16 %v372, %v371
      %v401 = vpack.c.b16 %v374, %v373
      %v402 = vpack.c.b16 %v376, %v375
      %v403 = vpack.c.b16 %v378, %v377
      %v404 = vpack.c.b16 %v380, %v379
      %v405 = vpack.c.b16 %v382, %v381
      %v406 = vpack.c.b16 %v384, %v383
      %v407 = vpack.c.b16 %v386, %v385
      %v408 = vpack.c.b16 %v388, %v387
      %v409 = vpack.c.b16 %v390, %v389
      %v410 = vpack.c.b16 %v392, %v391
      %v411 = vpack.c.b16 %v394, %v393
      %v412 = vpack.c.b16 %v396, %v395
      %429 = vmatprep.subr.bf16.mxu0 0
      %430 = vmatpush1.bf16.msra.mxu0 %v404
      %431 = vmatprep.subr.bf16.mxu0 0
      %432 = vmatpush1.bf16.msra.mxu0 %v403
      %433 = vmatprep.subr.bf16.mxu0 0
      %434 = vmatpush1.bf16.msra.mxu0 %v402
      %435 = vmatprep.subr.bf16.mxu0 0
      %436 = vmatpush1.bf16.msra.mxu0 %v401
      %437 = vmatprep.subr.bf16.mxu0 0
      %438 = vmatpush1.bf16.msra.mxu0 %v400
      %439 = vmatprep.subr.bf16.mxu0 0
      %440 = vmatpush1.bf16.msra.mxu0 %v399
      %441 = vmatprep.subr.bf16.mxu0 0
      %442 = vmatpush1.bf16.msra.mxu0 %v398
      %443 = vmatprep.subr.bf16.mxu0 0
      %444 = vmatpush1.bf16.msra.mxu0 %v397
      %445 = vmatprep.subr.bf16.mxu0 0
      %446 = vmatpush2.bf16.msra.mxu0 %v412
      %447 = vmatprep.subr.bf16.mxu0 0
      %448 = vmatpush2.bf16.msra.mxu0 %v411
      %449 = vmatprep.subr.bf16.mxu0 0
      %450 = vmatpush2.bf16.msra.mxu0 %v410
      %451 = vmatprep.subr.bf16.mxu0 0
      %452 = vmatpush2.bf16.msra.mxu0 %v409
      %453 = vmatprep.subr.bf16.mxu0 0
      %454 = vmatpush2.bf16.msra.mxu0 %v408
      %455 = vmatprep.subr.bf16.mxu0 0
      %456 = vmatpush2.bf16.msra.mxu0 %v407
      %457 = vmatprep.subr.bf16.mxu0 0
      %458 = vmatpush2.bf16.msra.mxu0 %v406
      %459 = vmatprep.subr.bf16.mxu0 0
      %460 = vmatpush2.bf16.msra.mxu0 %v405
      %461 = vmatprep.mubr.bf16.mxu0 %v318
      %462 = vmatmul.mubr.bf16.gmra.mxu0 %v317
      %v463 = vpop.f32.mrf.mxu0
      %v464 = vadd.f32 %v291, %v463
      %v465 = vpop.f32.mrf.mxu0
      %v466 = vpop.f32.mrf.mxu0
      %v467 = vadd.f32 %v291, %v466
      %v468 = vpop.f32.mrf.mxu0
      %469 = vmatprep.mubr.bf16.mxu0 %v320
      %470 = vmatmul.mubr.bf16.gmra.mxu0 %v319
      %v471 = vpop.f32.mrf.mxu0
      %v472 = vadd.f32 %v291, %v471
      %v473 = vpop.f32.mrf.mxu0
      %v474 = vpop.f32.mrf.mxu0
      %v475 = vadd.f32 %v291, %v474
      %v476 = vpop.f32.mrf.mxu0
      %477 = vmatprep.mubr.bf16.mxu0 %v322
      %478 = vmatmul.mubr.bf16.gmra.mxu0 %v321
      %v479 = vpop.f32.mrf.mxu0
      %v480 = vadd.f32 %v291, %v479
      %v481 = vpop.f32.mrf.mxu0
      %v482 = vpop.f32.mrf.mxu0
      %v483 = vadd.f32 %v291, %v482
      %v484 = vpop.f32.mrf.mxu0
      %485 = vmatprep.mubr.bf16.mxu0 %v324
      %486 = vmatmul.mubr.bf16.gmra.mxu0 %v323
      %v487 = vpop.f32.mrf.mxu0
      %v488 = vadd.f32 %v291, %v487
      %v489 = vpop.f32.mrf.mxu0
      %v490 = vpop.f32.mrf.mxu0
      %v491 = vadd.f32 %v291, %v490
      %v492 = vpop.f32.mrf.mxu0
      %493 = vdwg.mxu0
      %494 = vst [vmem:[%s227] sm:$0xff] %v464
      %495 = vst [vmem:[%s227 + $0x8] sm:$0xff] %v467
      %496 = vst [vmem:[%s227 + $0x10] sm:$0xff] %v472
      %497 = vst [vmem:[%s227 + $0x18] sm:$0xff] %v475
      %498 = vst [vmem:[%s227 + $0x20] sm:$0xff] %v480
      %499 = vst [vmem:[%s227 + $0x28] sm:$0xff] %v483
      %500 = vst [vmem:[%s227 + $0x30] sm:$0xff] %v488
      %501 = vst [vmem:[%s227 + $0x38] sm:$0xff] %v491
      %s502 = smul.u32 8, %s15
      %p503 = scmp.lt.s32.totalorder %s502, 15
      %s504 = scalar_select %p503, %s502, 15
      %s505 = smul.addr %s504, 8
      %s506 = scalar_lea.vmem %s4, %s505
      // Predicated region
      $region37: #{gcn_sampling_forward.6} parent=35 // pred_check
        %p507 = pneg %p127
      $region38: #{gcn_sampling_forward.6} parent=35 // pred_check_branch
        %509 = sbr.rel (%p507) target = $region40
      $region39: #{gcn_sampling_forward.6} parent=35 // pred_region
        %s510 = smul.u32 8, %s15
      $region40: #{gcn_sampling_forward.6} parent=35 // pred_fallthru
        _
    $region36: #{gcn_sampling_forward.6} parent=5 // pred_fallthru
      _
    %p511 = scmp.le.s32.totalorder 2, %s10
    // Predicated region
    $region41: #{gcn_sampling_forward.6} parent=5 // pred_check
      %p512 = pneg %p511
    $region42: #{gcn_sampling_forward.6} parent=5 // pred_check_branch
      %514 = sbr.rel (%p512) target = $region44
    $region43: #{gcn_sampling_forward.6} parent=5 // pred_region
      %s515 = ssub.s32 %s10, 2
      // Predicated region
      $region45: #{gcn_sampling_forward.6} parent=43 // pred_check
        %p516 = pneg %p133
      $region46: #{gcn_sampling_forward.6} parent=43 // pred_check_branch
        %518 = sbr.rel (%p516) target = $region48
      $region47: #{gcn_sampling_forward.6} parent=43 // pred_region
        %s519 = smul.u32 8, %s16
        %p520 = scmp.lt.s32.totalorder %s519, 15
        %s521 = scalar_select %p520, %s519, 15
        %s522 = smul.addr %s521, 8
        %s523 = scalar_lea.vmem %s4, %s522
      $region48: #{gcn_sampling_forward.6} parent=43 // pred_fallthru
        _
    $region44: #{gcn_sampling_forward.6} parent=5 // pred_fallthru
      _
  $region6: #{gcn_sampling_forward.6} parent=0 // loop_footer
    %s14 = sadd.s32 1, %s10
  $region7: #{gcn_sampling_forward.6} parent=0 // loop_footer_branch
    %9 = sbr.rel target = $region3
  $region8: #{gcn_sampling_forward.6} parent=0 // loop_exit
    _

// kernel: gcn_sampling_forward.9
$region0: #{gcn_sampling_forward.9}
  #allocation0 [shape = 'u32[]', space=smem, size = 0x4, offset = 0x4, fixed_abs, tag = 'smem constant byte address 0x4 - core index']
  #allocation1 [shape = 'u32[144,128]{1,0:T(1,128)}', space=vmem, size = 0x12000, scoped, tag = 'internal scratch']
  #allocation2 [shape = 's32[1]{0}', space=sflag, size = 0x4, scoped, tag = 'scoped memory for gcn_sampling_forward.9']
  #allocation3 [shape = 'u8[16384]{0}', space=smem, size = 0x4000, scoped, tag = 'prefetched SMEM operand 0']
  %s0 = inlined_call_operand.vmem [shape: s32[32,4], index: 0, kind: input, shape index: {}]
  %s1 = inlined_call_operand.vmem [shape: f32[64,1,128], index: 1, kind: input, shape index: {}, may-alias: {1,2,3,4}]
  %s2 = inlined_call_operand.vmem [shape: f32[64,1,128], index: 2, kind: input, shape index: {}, may-alias: {1,2,3,4}]
  %s3 = inlined_call_operand.vmem [shape: f32[64,1,128], index: 3, kind: input, shape index: {}, may-alias: {1,2,3,4}]
  %s4 = inlined_call_operand.vmem [shape: f32[64,1,128], index: 4, kind: input, shape index: {}, may-alias: {1,2,3,4}]
  %s5 = inlined_call_operand.vmem [shape: f32[32,1,128], index: 5, kind: output, shape index: {}]
  %s6 = sld [smem:[#allocation0]]
  $region49: #{gcn_sampling_forward.9} parent=0
    _
  %s8 = ssub.s32 1, %s6
  %s9 = scalar_select 0, %s8, %s6
  %s10 = sshll.u32 %s0, 4
  %s11 = int_to_ptr.vmem [resolvable:$true] %s10
  %13 = dma.vmem_to_smem %s11, 512, [#allocation3], [#allocation2]
  %14 = dma.done [#allocation2], 512
  %15 = sfence
  loop: start=0, step=1, limit=34
  $region2: #{gcn_sampling_forward.9} parent=0 // loop_pre_header
    _
  $region3: #{gcn_sampling_forward.9} parent=0 // loop_header
    %s17 = sphi 0, %s21
    %p18 = scmp.ge.s32.totalorder %s17, 34
    %s31 = sphi 0, %s33
    %s34 = sphi 0, %s31
    %s35 = sphi 0, %s34
    %s51 = sphi 0, %s35
    %s63 = sphi 0, %s65
    %s66 = sphi 0, %s63
    %s67 = sphi 0, %s66
    %s83 = sphi 0, %s67
    %s95 = sphi 0, %s97
    %s98 = sphi 0, %s95
    %s99 = sphi 0, %s98
    %s115 = sphi 0, %s99
    %s127 = sphi 0, %s129
    %s130 = sphi 0, %s127
    %s131 = sphi 0, %s130
    %s147 = sphi 0, %s131
    %s153 = sphi 0, %s155
    %s156 = sphi 0, %s153
    %s157 = sphi 0, %s156
    %s173 = sphi 0, %s157
  $region4: #{gcn_sampling_forward.9} parent=0 // loop_header_branch
    %20 = sbr.rel (%p18) target = $region8
  $region5: #{gcn_sampling_forward.9} parent=0 // loop_body
    %s22 = ssub.s32 %s17, 1
    %s23 = ssub.s32 %s17, 2
    %s24 = sadd.s32 %s17, 1
    %s25 = smul.u32 %s17, 128
    %s26 = sld [smem:[#allocation3 + %s25]]
    %s27 = smul.u32 %s24, 128
    %s28 = sld [smem:[#allocation3 + %s27]]
    %s29 = ssub.s32 %s26, %s28
    %p30 = scmp.eq.s32.totalorder %s29, 0
    %s32 = sadd.s32 %s31, 1
    %s33 = scalar_select %p30, %s31, %s32
    %p36 = pneg %p30
    %p37 = scmp.eq.s32.totalorder %s17, 31
    %p38 = por %p36, %p37
    %p39 = scmp.ne.s32.totalorder %s31, %s34
    %p40 = scmp.eq.s32.totalorder %s17, 0
    %p41 = por %p39, %p40
    %p42 = scmp.ne.s32.totalorder %s31, %s34
    %p43 = scmp.eq.s32.totalorder %s22, 31
    %p44 = por %p42, %p43
    %p45 = scmp.ne.s32.totalorder %s34, %s35
    %p46 = scmp.eq.s32.totalorder %s22, 0
    %p47 = por %p45, %p46
    %p48 = scmp.ne.s32.totalorder %s34, %s35
    %p49 = scmp.eq.s32.totalorder %s23, 31
    %p50 = por %p48, %p49
    %p52 = scmp.ne.s32.totalorder %s35, %s51
    %p53 = scmp.eq.s32.totalorder %s23, 0
    %p54 = por %p52, %p53
    %s55 = smul.u32 %s17, 128
    %s56 = sadd.s32 %s55, 1
    %s57 = sld [smem:[#allocation3 + %s56]]
    %s58 = smul.u32 %s24, 128
    %s59 = sadd.s32 %s58, 1
    %s60 = sld [smem:[#allocation3 + %s59]]
    %s61 = ssub.s32 %s57, %s60
    %p62 = scmp.eq.s32.totalorder %s61, 0
    %s64 = sadd.s32 %s63, 1
    %s65 = scalar_select %p62, %s63, %s64
    %p68 = pneg %p62
    %p69 = scmp.eq.s32.totalorder %s17, 31
    %p70 = por %p68, %p69
    %p71 = scmp.ne.s32.totalorder %s63, %s66
    %p72 = scmp.eq.s32.totalorder %s17, 0
    %p73 = por %p71, %p72
    %p74 = scmp.ne.s32.totalorder %s63, %s66
    %p75 = scmp.eq.s32.totalorder %s22, 31
    %p76 = por %p74, %p75
    %p77 = scmp.ne.s32.totalorder %s66, %s67
    %p78 = scmp.eq.s32.totalorder %s22, 0
    %p79 = por %p77, %p78
    %p80 = scmp.ne.s32.totalorder %s66, %s67
    %p81 = scmp.eq.s32.totalorder %s23, 31
    %p82 = por %p80, %p81
    %p84 = scmp.ne.s32.totalorder %s67, %s83
    %p85 = scmp.eq.s32.totalorder %s23, 0
    %p86 = por %p84, %p85
    %s87 = smul.u32 %s17, 128
    %s88 = sadd.s32 %s87, 2
    %s89 = sld [smem:[#allocation3 + %s88]]
    %s90 = smul.u32 %s24, 128
    %s91 = sadd.s32 %s90, 2
    %s92 = sld [smem:[#allocation3 + %s91]]
    %s93 = ssub.s32 %s89, %s92
    %p94 = scmp.eq.s32.totalorder %s93, 0
    %s96 = sadd.s32 %s95, 1
    %s97 = scalar_select %p94, %s95, %s96
    %p100 = pneg %p94
    %p101 = scmp.eq.s32.totalorder %s17, 31
    %p102 = por %p100, %p101
    %p103 = scmp.ne.s32.totalorder %s95, %s98
    %p104 = scmp.eq.s32.totalorder %s17, 0
    %p105 = por %p103, %p104
    %p106 = scmp.ne.s32.totalorder %s95, %s98
    %p107 = scmp.eq.s32.totalorder %s22, 31
    %p108 = por %p106, %p107
    %p109 = scmp.ne.s32.totalorder %s98, %s99
    %p110 = scmp.eq.s32.totalorder %s22, 0
    %p111 = por %p109, %p110
    %p112 = scmp.ne.s32.totalorder %s98, %s99
    %p113 = scmp.eq.s32.totalorder %s23, 31
    %p114 = por %p112, %p113
    %p116 = scmp.ne.s32.totalorder %s99, %s115
    %p117 = scmp.eq.s32.totalorder %s23, 0
    %p118 = por %p116, %p117
    %s119 = smul.u32 %s17, 128
    %s120 = sadd.s32 %s119, 3
    %s121 = sld [smem:[#allocation3 + %s120]]
    %s122 = smul.u32 %s24, 128
    %s123 = sadd.s32 %s122, 3
    %s124 = sld [smem:[#allocation3 + %s123]]
    %s125 = ssub.s32 %s121, %s124
    %p126 = scmp.eq.s32.totalorder %s125, 0
    %s128 = sadd.s32 %s127, 1
    %s129 = scalar_select %p126, %s127, %s128
    %p132 = pneg %p126
    %p133 = scmp.eq.s32.totalorder %s17, 31
    %p134 = por %p132, %p133
    %p135 = scmp.ne.s32.totalorder %s127, %s130
    %p136 = scmp.eq.s32.totalorder %s17, 0
    %p137 = por %p135, %p136
    %p138 = scmp.ne.s32.totalorder %s127, %s130
    %p139 = scmp.eq.s32.totalorder %s22, 31
    %p140 = por %p138, %p139
    %p141 = scmp.ne.s32.totalorder %s130, %s131
    %p142 = scmp.eq.s32.totalorder %s22, 0
    %p143 = por %p141, %p142
    %p144 = scmp.ne.s32.totalorder %s130, %s131
    %p145 = scmp.eq.s32.totalorder %s23, 31
    %p146 = por %p144, %p145
    %p148 = scmp.ne.s32.totalorder %s131, %s147
    %p149 = scmp.eq.s32.totalorder %s23, 0
    %p150 = por %p148, %p149
    %s151 = ssub.s32 %s17, %s24
    %p152 = scmp.eq.s32.totalorder %s151, 0
    %s154 = sadd.s32 %s153, 1
    %s155 = scalar_select %p152, %s153, %s154
    %p158 = pneg %p152
    %p159 = scmp.eq.s32.totalorder %s17, 31
    %p160 = por %p158, %p159
    %p161 = scmp.ne.s32.totalorder %s153, %s156
    %p162 = scmp.eq.s32.totalorder %s17, 0
    %p163 = por %p161, %p162
    %p164 = scmp.ne.s32.totalorder %s153, %s156
    %p165 = scmp.eq.s32.totalorder %s22, 31
    %p166 = por %p164, %p165
    %p167 = scmp.ne.s32.totalorder %s156, %s157
    %p168 = scmp.eq.s32.totalorder %s22, 0
    %p169 = por %p167, %p168
    %p170 = scmp.ne.s32.totalorder %s156, %s157
    %p171 = scmp.eq.s32.totalorder %s23, 31
    %p172 = por %p170, %p171
    %p174 = scmp.ne.s32.totalorder %s157, %s173
    %p175 = scmp.eq.s32.totalorder %s23, 0
    %p176 = por %p174, %p175
    %p177 = scmp.le.s32.totalorder 1, %s17
    %p178 = scmp.lt.s32.totalorder %s17, 33
    %p179 = pnand %p177, %p178
    %p180 = pneg %p179
    // Predicated region
    $region9: #{gcn_sampling_forward.9} parent=5 // pred_check
      _
    $region10: #{gcn_sampling_forward.9} parent=5 // pred_check_branch
      %182 = sbr.rel (%p179) target = $region12
    $region11: #{gcn_sampling_forward.9} parent=5 // pred_region
      %s183 = ssub.s32 %s17, 1
    $region12: #{gcn_sampling_forward.9} parent=5 // pred_fallthru
      _
    %p184 = scmp.lt.s32.totalorder %s17, 32
    // Predicated region
    $region13: #{gcn_sampling_forward.9} parent=5 // pred_check
      %p185 = pneg %p184
    $region14: #{gcn_sampling_forward.9} parent=5 // pred_check_branch
      %187 = sbr.rel (%p185) target = $region16
    $region15: #{gcn_sampling_forward.9} parent=5 // pred_region
      // Predicated region
      $region17: #{gcn_sampling_forward.9} parent=15 // pred_check
        %p188 = pneg %p41
      $region18: #{gcn_sampling_forward.9} parent=15 // pred_check_branch
        %190 = sbr.rel (%p188) target = $region20
      $region19: #{gcn_sampling_forward.9} parent=15 // pred_region
        %s191 = smul.u32 %s17, 128
        %s192 = sld [smem:[#allocation3 + %s191]]
        %p193 = scmp.lt.s32.totalorder %s192, 63
        %s194 = scalar_select %p193, %s192, 63
        %s195 = scalar_lea.vmem %s1, %s194
        %s196 = smul.u32 %s17, 128
        %s197 = sld [smem:[#allocation3 + %s196]]
      $region20: #{gcn_sampling_forward.9} parent=15 // pred_fallthru
        _
      // Predicated region
      $region21: #{gcn_sampling_forward.9} parent=15 // pred_check
        %p198 = pneg %p73
      $region22: #{gcn_sampling_forward.9} parent=15 // pred_check_branch
        %200 = sbr.rel (%p198) target = $region24
      $region23: #{gcn_sampling_forward.9} parent=15 // pred_region
        %s201 = smul.u32 %s17, 128
        %s202 = sadd.s32 %s201, 1
        %s203 = sld [smem:[#allocation3 + %s202]]
        %p204 = scmp.lt.s32.totalorder %s203, 63
        %s205 = scalar_select %p204, %s203, 63
        %s206 = scalar_lea.vmem %s2, %s205
        %s207 = smul.u32 %s17, 128
        %s208 = sadd.s32 %s207, 1
        %s209 = sld [smem:[#allocation3 + %s208]]
      $region24: #{gcn_sampling_forward.9} parent=15 // pred_fallthru
        _
      // Predicated region
      $region25: #{gcn_sampling_forward.9} parent=15 // pred_check
        %p210 = pneg %p105
      $region26: #{gcn_sampling_forward.9} parent=15 // pred_check_branch
        %212 = sbr.rel (%p210) target = $region28
      $region27: #{gcn_sampling_forward.9} parent=15 // pred_region
        %s213 = smul.u32 %s17, 128
        %s214 = sadd.s32 %s213, 2
        %s215 = sld [smem:[#allocation3 + %s214]]
        %p216 = scmp.lt.s32.totalorder %s215, 63
        %s217 = scalar_select %p216, %s215, 63
        %s218 = scalar_lea.vmem %s3, %s217
        %s219 = smul.u32 %s17, 128
        %s220 = sadd.s32 %s219, 2
        %s221 = sld [smem:[#allocation3 + %s220]]
      $region28: #{gcn_sampling_forward.9} parent=15 // pred_fallthru
        _
      // Predicated region
      $region29: #{gcn_sampling_forward.9} parent=15 // pred_check
        %p222 = pneg %p137
      $region30: #{gcn_sampling_forward.9} parent=15 // pred_check_branch
        %224 = sbr.rel (%p222) target = $region32
      $region31: #{gcn_sampling_forward.9} parent=15 // pred_region
        %s225 = smul.u32 %s17, 128
        %s226 = sadd.s32 %s225, 3
        %s227 = sld [smem:[#allocation3 + %s226]]
        %p228 = scmp.lt.s32.totalorder %s227, 63
        %s229 = scalar_select %p228, %s227, 63
        %s230 = scalar_lea.vmem %s4, %s229
        %s231 = smul.u32 %s17, 128
        %s232 = sadd.s32 %s231, 3
        %s233 = sld [smem:[#allocation3 + %s232]]
      $region32: #{gcn_sampling_forward.9} parent=15 // pred_fallthru
        _
    $region16: #{gcn_sampling_forward.9} parent=5 // pred_fallthru
      _
    %p234 = scmp.le.s32.totalorder 1, %s17
    %p235 = scmp.lt.s32.totalorder %s17, 33
    %p236 = pnand %p234, %p235
    %p237 = pneg %p236
    // Predicated region
    $region33: #{gcn_sampling_forward.9} parent=5 // pred_check
      _
    $region34: #{gcn_sampling_forward.9} parent=5 // pred_check_branch
      %239 = sbr.rel (%p236) target = $region36
    $region35: #{gcn_sampling_forward.9} parent=5 // pred_region
      %s240 = ssub.s32 %s17, 1
      %s241 = smul.u32 %s22, 128
      %s242 = sld [smem:[#allocation3 + %s241]]
      %p243 = scmp.lt.s32.totalorder %s242, 63
      %s244 = scalar_select %p243, %s242, 63
      %s245 = scalar_lea.vmem %s1, %s244
      %p246 = pneg %p47
      %p247 = pneg %p44
      %s248 = smul.u32 %s22, 128
      %s249 = sadd.s32 %s248, 1
      %s250 = sld [smem:[#allocation3 + %s249]]
      %p251 = scmp.lt.s32.totalorder %s250, 63
      %s252 = scalar_select %p251, %s250, 63
      %s253 = scalar_lea.vmem %s2, %s252
      %p254 = pneg %p79
      %p255 = pneg %p76
      %s256 = smul.u32 %s22, 128
      %s257 = sadd.s32 %s256, 2
      %s258 = sld [smem:[#allocation3 + %s257]]
      %p259 = scmp.lt.s32.totalorder %s258, 63
      %s260 = scalar_select %p259, %s258, 63
      %s261 = scalar_lea.vmem %s3, %s260
      %p262 = pneg %p111
      %p263 = pneg %p108
      %s264 = smul.u32 %s22, 128
      %s265 = sadd.s32 %s264, 3
      %s266 = sld [smem:[#allocation3 + %s265]]
      %p267 = scmp.lt.s32.totalorder %s266, 63
      %s268 = scalar_select %p267, %s266, 63
      %s269 = scalar_lea.vmem %s4, %s268
      %p270 = pneg %p143
      %p271 = pneg %p140
      %p272 = pneg %p169
      %p273 = pneg %p166
      %p274 = scmp.lt.s32.totalorder %s22, 31
      %s275 = scalar_select %p274, %s22, 31
      %s276 = scalar_lea.vmem %s5, %s275
      %s277 = smul.u32 %s22, 128
      %s278 = sld [smem:[#allocation3 + %s277]]
      %p279 = scmp.lt.s32.totalorder %s278, 63
      %s280 = scalar_select %p279, %s278, 63
      %s281 = scalar_lea.vmem %s1, %s280
      %s282 = smul.u32 %s22, 128
      %s283 = sld [smem:[#allocation3 + %s282]]
      %s284 = smul.u32 %s22, 128
      %s285 = sadd.s32 %s284, 1
      %s286 = sld [smem:[#allocation3 + %s285]]
      %p287 = scmp.lt.s32.totalorder %s286, 63
      %s288 = scalar_select %p287, %s286, 63
      %s289 = scalar_lea.vmem %s2, %s288
      %s290 = smul.u32 %s22, 128
      %s291 = sadd.s32 %s290, 1
      %s292 = sld [smem:[#allocation3 + %s291]]
      %s293 = smul.u32 %s22, 128
      %s294 = sadd.s32 %s293, 2
      %s295 = sld [smem:[#allocation3 + %s294]]
      %p296 = scmp.lt.s32.totalorder %s295, 63
      %s297 = scalar_select %p296, %s295, 63
      %s298 = scalar_lea.vmem %s3, %s297
      %s299 = smul.u32 %s22, 128
      %s300 = sadd.s32 %s299, 2
      %s301 = sld [smem:[#allocation3 + %s300]]
      %s302 = smul.u32 %s22, 128
      %s303 = sadd.s32 %s302, 3
      %s304 = sld [smem:[#allocation3 + %s303]]
      %p305 = scmp.lt.s32.totalorder %s304, 63
      %s306 = scalar_select %p305, %s304, 63
      %s307 = scalar_lea.vmem %s4, %s306
      %s308 = smul.u32 %s22, 128
      %s309 = sadd.s32 %s308, 3
      %s310 = sld [smem:[#allocation3 + %s309]]
      %p311 = scmp.lt.s32.totalorder %s22, 31
      %s312 = scalar_select %p311, %s22, 31
      %s313 = scalar_lea.vmem %s5, %s312
      %v314 = vld [vmem:[%s281] sm:$0x1]
      %v315 = vld [vmem:[%s289] sm:$0x1]
      %v316 = vadd.f32 %v314, %v315
      %v317 = vld [vmem:[%s298] sm:$0x1]
      %v318 = vadd.f32 %v316, %v317
      %v319 = vld [vmem:[%s307] sm:$0x1]
      %v320 = vadd.f32 %v318, %v319
      %v321 = vmul.f32 %v320, 0.25
      %322 = vst [vmem:[%s313] sm:$0x1] %v321
      %p323 = scmp.lt.s32.totalorder %s22, 31
      %s324 = scalar_select %p323, %s22, 31
      %s325 = scalar_lea.vmem %s5, %s324
      // Predicated region
      $region37: #{gcn_sampling_forward.9} parent=35 // pred_check
        %p326 = pneg %p166
      $region38: #{gcn_sampling_forward.9} parent=35 // pred_check_branch
        %328 = sbr.rel (%p326) target = $region40
      $region39: #{gcn_sampling_forward.9} parent=35 // pred_region
        _
      $region40: #{gcn_sampling_forward.9} parent=35 // pred_fallthru
        _
    $region36: #{gcn_sampling_forward.9} parent=5 // pred_fallthru
      _
    %p329 = scmp.le.s32.totalorder 2, %s17
    // Predicated region
    $region41: #{gcn_sampling_forward.9} parent=5 // pred_check
      %p330 = pneg %p329
    $region42: #{gcn_sampling_forward.9} parent=5 // pred_check_branch
      %332 = sbr.rel (%p330) target = $region44
    $region43: #{gcn_sampling_forward.9} parent=5 // pred_region
      %s333 = ssub.s32 %s17, 2
      // Predicated region
      $region45: #{gcn_sampling_forward.9} parent=43 // pred_check
        %p334 = pneg %p172
      $region46: #{gcn_sampling_forward.9} parent=43 // pred_check_branch
        %336 = sbr.rel (%p334) target = $region48
      $region47: #{gcn_sampling_forward.9} parent=43 // pred_region
        %p337 = scmp.lt.s32.totalorder %s23, 31
        %s338 = scalar_select %p337, %s23, 31
        %s339 = scalar_lea.vmem %s5, %s338
      $region48: #{gcn_sampling_forward.9} parent=43 // pred_fallthru
        _
    $region44: #{gcn_sampling_forward.9} parent=5 // pred_fallthru
      _
  $region6: #{gcn_sampling_forward.9} parent=0 // loop_footer
    %s21 = sadd.s32 1, %s17
  $region7: #{gcn_sampling_forward.9} parent=0 // loop_footer_branch
    %16 = sbr.rel target = $region3
  $region8: #{gcn_sampling_forward.9} parent=0 // loop_exit
    _

// kernel: gcn_sampling_forward.8
$region0: #{gcn_sampling_forward.8}
  #allocation0 [shape = 'u32[]', space=smem, size = 0x4, offset = 0x4, fixed_abs, tag = 'smem constant byte address 0x4 - core index']
  #allocation1 [shape = 'u32[144,128]{1,0:T(1,128)}', space=vmem, size = 0x12000, scoped, tag = 'internal scratch']
  %s0 = inlined_call_operand.vmem [shape: f32[64,128], index: 0, kind: input, shape index: {}]
  %s1 = inlined_call_operand.vmem [shape: bf16[64,128], index: 1, kind: input, shape index: {}]
  %s2 = inlined_call_operand.vmem [shape: bf16[64,128], index: 2, kind: input, shape index: {}]
  %s3 = inlined_call_operand.vmem [shape: bf16[128,128], index: 3, kind: input, shape index: {}]
  %s4 = inlined_call_operand.vmem [shape: bf16[128,128], index: 4, kind: input, shape index: {}]
  %s5 = inlined_call_operand.vmem [shape: f32[1,128], index: 5, kind: input, shape index: {}]
  %s6 = inlined_call_operand.vmem [shape: f32[64,128], index: 6, kind: output, shape index: {}]
  %s7 = sld [smem:[#allocation0]]
  $region34: #{gcn_sampling_forward.8} parent=0
    _
  %s9 = ssub.s32 1, %s7
  %s10 = scalar_select 0, %s9, %s7
  // Predicated region
  $region2: #{gcn_sampling_forward.8} parent=0 // pred_check
    _
  $region3: #{gcn_sampling_forward.8} parent=0 // pred_check_branch
    %12 = sbr.rel (0) target = $region5
  $region4: #{gcn_sampling_forward.8} parent=0 // pred_region
    _
  $region5: #{gcn_sampling_forward.8} parent=0 // pred_fallthru
    _
  // Predicated region
  $region6: #{gcn_sampling_forward.8} parent=0 // pred_check
    _
  $region7: #{gcn_sampling_forward.8} parent=0 // pred_check_branch
    %14 = sbr.rel (0) target = $region9
  $region8: #{gcn_sampling_forward.8} parent=0 // pred_region
    _
  $region9: #{gcn_sampling_forward.8} parent=0 // pred_fallthru
    _
  // Predicated region
  $region10: #{gcn_sampling_forward.8} parent=0 // pred_check
    _
  $region11: #{gcn_sampling_forward.8} parent=0 // pred_check_branch
    %16 = sbr.rel (0) target = $region13
  $region12: #{gcn_sampling_forward.8} parent=0 // pred_region
    _
  $region13: #{gcn_sampling_forward.8} parent=0 // pred_fallthru
    _
  // Predicated region
  $region14: #{gcn_sampling_forward.8} parent=0 // pred_check
    _
  $region15: #{gcn_sampling_forward.8} parent=0 // pred_check_branch
    %18 = sbr.rel (0) target = $region17
  $region16: #{gcn_sampling_forward.8} parent=0 // pred_region
    _
  $region17: #{gcn_sampling_forward.8} parent=0 // pred_fallthru
    _
  // Predicated region
  $region18: #{gcn_sampling_forward.8} parent=0 // pred_check
    _
  $region19: #{gcn_sampling_forward.8} parent=0 // pred_check_branch
    %20 = sbr.rel (0) target = $region21
  $region20: #{gcn_sampling_forward.8} parent=0 // pred_region
    _
  $region21: #{gcn_sampling_forward.8} parent=0 // pred_fallthru
    _
  // Predicated region
  $region22: #{gcn_sampling_forward.8} parent=0 // pred_check
    _
  $region23: #{gcn_sampling_forward.8} parent=0 // pred_check_branch
    %22 = sbr.rel (0) target = $region25
  $region24: #{gcn_sampling_forward.8} parent=0 // pred_region
    _
  $region25: #{gcn_sampling_forward.8} parent=0 // pred_fallthru
    _
  %v24 = vld [vmem:[%s0] sm:$0xff]
  %v25 = vld [vmem:[%s0 + $0x8] sm:$0xff]
  %v26 = vld [vmem:[%s0 + $0x10] sm:$0xff]
  %v27 = vld [vmem:[%s0 + $0x18] sm:$0xff]
  %v28 = vld [vmem:[%s0 + $0x20] sm:$0xff]
  %v29 = vld [vmem:[%s0 + $0x28] sm:$0xff]
  %v30 = vld [vmem:[%s0 + $0x30] sm:$0xff]
  %v31 = vld [vmem:[%s0 + $0x38] sm:$0xff]
  %v32 = vpack.c.bf16 %v25, %v24
  %v33 = vpack.c.bf16 %v27, %v26
  %v34 = vpack.c.bf16 %v29, %v28
  %v35 = vpack.c.bf16 %v31, %v30
  %v36 = vld [vmem:[%s1] sm:$0xf]
  %v37 = vld [vmem:[%s1 + $0x4] sm:$0xf]
  %v38 = vld [vmem:[%s1 + $0x8] sm:$0xf]
  %v39 = vld [vmem:[%s1 + $0xc] sm:$0xf]
  %v40 = vld [vmem:[%s1 + $0x10] sm:$0xf]
  %v41 = vld [vmem:[%s1 + $0x14] sm:$0xf]
  %v42 = vld [vmem:[%s1 + $0x18] sm:$0xf]
  %v43 = vld [vmem:[%s1 + $0x1c] sm:$0xf]
  %v52 = vunpack.c.l.b16 %v36
  %v53 = vunpack.c.l.b16 %v37
  %v54 = vunpack.c.l.b16 %v38
  %v55 = vunpack.c.l.b16 %v39
  %v56 = vunpack.c.l.b16 %v40
  %v57 = vunpack.c.l.b16 %v41
  %v58 = vunpack.c.l.b16 %v42
  %v59 = vunpack.c.l.b16 %v43
  %v60 = vpack.c.b16 %v53, %v52
  %v61 = vpack.c.b16 %v55, %v54
  %v62 = vpack.c.b16 %v57, %v56
  %v63 = vpack.c.b16 %v59, %v58
  %v68 = vmul.bf16 %v32, %v60
  %v69 = vmul.bf16 %v33, %v61
  %v70 = vmul.bf16 %v34, %v62
  %v71 = vmul.bf16 %v35, %v63
  %v72 = vmax.f32 %v24, 0.0
  %v73 = vmax.f32 %v25, 0.0
  %v74 = vmax.f32 %v26, 0.0
  %v75 = vmax.f32 %v27, 0.0
  %v76 = vmax.f32 %v28, 0.0
  %v77 = vmax.f32 %v29, 0.0
  %v78 = vmax.f32 %v30, 0.0
  %v79 = vmax.f32 %v31, 0.0
  %v80 = vpack.c.bf16 %v73, %v72
  %v81 = vpack.c.bf16 %v75, %v74
  %v82 = vpack.c.bf16 %v77, %v76
  %v83 = vpack.c.bf16 %v79, %v78
  %v84 = vld [vmem:[%s2] sm:$0xf]
  %v85 = vld [vmem:[%s2 + $0x4] sm:$0xf]
  %v86 = vld [vmem:[%s2 + $0x8] sm:$0xf]
  %v87 = vld [vmem:[%s2 + $0xc] sm:$0xf]
  %v88 = vld [vmem:[%s2 + $0x10] sm:$0xf]
  %v89 = vld [vmem:[%s2 + $0x14] sm:$0xf]
  %v90 = vld [vmem:[%s2 + $0x18] sm:$0xf]
  %v91 = vld [vmem:[%s2 + $0x1c] sm:$0xf]
  %v100 = vunpack.c.l.b16 %v84
  %v101 = vunpack.c.l.b16 %v85
  %v102 = vunpack.c.l.b16 %v86
  %v103 = vunpack.c.l.b16 %v87
  %v104 = vunpack.c.l.b16 %v88
  %v105 = vunpack.c.l.b16 %v89
  %v106 = vunpack.c.l.b16 %v90
  %v107 = vunpack.c.l.b16 %v91
  %v108 = vpack.c.b16 %v101, %v100
  %v109 = vpack.c.b16 %v103, %v102
  %v110 = vpack.c.b16 %v105, %v104
  %v111 = vpack.c.b16 %v107, %v106
  %v116 = vmul.bf16 %v80, %v108
  %v117 = vmul.bf16 %v81, %v109
  %v118 = vmul.bf16 %v82, %v110
  %v119 = vmul.bf16 %v83, %v111
  %v120 = vld [vmem:[%s3] sm:$0xf]
  %v121 = vld [vmem:[%s3 + $0x4] sm:$0xf]
  %v122 = vld [vmem:[%s3 + $0x8] sm:$0xf]
  %v123 = vld [vmem:[%s3 + $0xc] sm:$0xf]
  %v124 = vld [vmem:[%s3 + $0x10] sm:$0xf]
  %v125 = vld [vmem:[%s3 + $0x14] sm:$0xf]
  %v126 = vld [vmem:[%s3 + $0x18] sm:$0xf]
  %v127 = vld [vmem:[%s3 + $0x1c] sm:$0xf]
  %v128 = vld [vmem:[%s3 + $0x20] sm:$0xf]
  %v129 = vld [vmem:[%s3 + $0x24] sm:$0xf]
  %v130 = vld [vmem:[%s3 + $0x28] sm:$0xf]
  %v131 = vld [vmem:[%s3 + $0x2c] sm:$0xf]
  %v132 = vld [vmem:[%s3 + $0x30] sm:$0xf]
  %v133 = vld [vmem:[%s3 + $0x34] sm:$0xf]
  %v134 = vld [vmem:[%s3 + $0x38] sm:$0xf]
  %v135 = vld [vmem:[%s3 + $0x3c] sm:$0xf]
  %v136 = vld [vmem:[%s4] sm:$0xf]
  %v137 = vld [vmem:[%s4 + $0x4] sm:$0xf]
  %v138 = vld [vmem:[%s4 + $0x8] sm:$0xf]
  %v139 = vld [vmem:[%s4 + $0xc] sm:$0xf]
  %v140 = vld [vmem:[%s4 + $0x10] sm:$0xf]
  %v141 = vld [vmem:[%s4 + $0x14] sm:$0xf]
  %v142 = vld [vmem:[%s4 + $0x18] sm:$0xf]
  %v143 = vld [vmem:[%s4 + $0x1c] sm:$0xf]
  %v144 = vld [vmem:[%s4 + $0x20] sm:$0xf]
  %v145 = vld [vmem:[%s4 + $0x24] sm:$0xf]
  %v146 = vld [vmem:[%s4 + $0x28] sm:$0xf]
  %v147 = vld [vmem:[%s4 + $0x2c] sm:$0xf]
  %v148 = vld [vmem:[%s4 + $0x30] sm:$0xf]
  %v149 = vld [vmem:[%s4 + $0x34] sm:$0xf]
  %v150 = vld [vmem:[%s4 + $0x38] sm:$0xf]
  %v151 = vld [vmem:[%s4 + $0x3c] sm:$0xf]
  %v168 = vunpack.c.l.b16 %v136
  %v169 = vunpack.c.l.b16 %v137
  %v170 = vunpack.c.l.b16 %v138
  %v171 = vunpack.c.l.b16 %v139
  %v172 = vunpack.c.l.b16 %v140
  %v173 = vunpack.c.l.b16 %v141
  %v174 = vunpack.c.l.b16 %v142
  %v175 = vunpack.c.l.b16 %v143
  %v176 = vunpack.c.l.b16 %v144
  %v177 = vunpack.c.l.b16 %v145
  %v178 = vunpack.c.l.b16 %v146
  %v179 = vunpack.c.l.b16 %v147
  %v180 = vunpack.c.l.b16 %v148
  %v181 = vunpack.c.l.b16 %v149
  %v182 = vunpack.c.l.b16 %v150
  %v183 = vunpack.c.l.b16 %v151
  %v184 = vpack.c.b16 %v169, %v168
  %v185 = vpack.c.b16 %v171, %v170
  %v186 = vpack.c.b16 %v173, %v172
  %v187 = vpack.c.b16 %v175, %v174
  %v188 = vpack.c.b16 %v177, %v176
  %v189 = vpack.c.b16 %v179, %v178
  %v190 = vpack.c.b16 %v181, %v180
  %v191 = vpack.c.b16 %v183, %v182
  %200 = vmatprep.subr.bf16.mxu0 0
  %201 = vmatpush1.bf16.msra.mxu0 %v191
  %202 = vmatprep.subr.bf16.mxu0 0
  %203 = vmatpush1.bf16.msra.mxu0 %v190
  %204 = vmatprep.subr.bf16.mxu0 0
  %205 = vmatpush1.bf16.msra.mxu0 %v189
  %206 = vmatprep.subr.bf16.mxu0 0
  %207 = vmatpush1.bf16.msra.mxu0 %v188
  %208 = vmatprep.subr.bf16.mxu0 0
  %209 = vmatpush1.bf16.msra.mxu0 %v187
  %210 = vmatprep.subr.bf16.mxu0 0
  %211 = vmatpush1.bf16.msra.mxu0 %v186
  %212 = vmatprep.subr.bf16.mxu0 0
  %213 = vmatpush1.bf16.msra.mxu0 %v185
  %214 = vmatprep.subr.bf16.mxu0 0
  %215 = vmatpush1.bf16.msra.mxu0 %v184
  %216 = vmatprep.subr.bf16.mxu0 0
  %217 = vmatpush2.bf16.msra.mxu0 0
  %218 = vmatprep.subr.bf16.mxu0 0
  %219 = vmatpush2.bf16.msra.mxu0 0
  %220 = vmatprep.subr.bf16.mxu0 0
  %221 = vmatpush2.bf16.msra.mxu0 0
  %222 = vmatprep.subr.bf16.mxu0 0
  %223 = vmatpush2.bf16.msra.mxu0 0
  %224 = vmatprep.subr.bf16.mxu0 0
  %225 = vmatpush2.bf16.msra.mxu0 0
  %226 = vmatprep.subr.bf16.mxu0 0
  %227 = vmatpush2.bf16.msra.mxu0 0
  %228 = vmatprep.subr.bf16.mxu0 0
  %229 = vmatpush2.bf16.msra.mxu0 0
  %230 = vmatprep.subr.bf16.mxu0 0
  %231 = vmatpush2.bf16.msra.mxu0 0
  %232 = vmatprep.mubr.bf16.mxu0 0
  %233 = vmatmul.mubr.bf16.gmra.mxu0 %v116
  %v234 = vpop.f32.mrf.mxu0
  %v235 = vadd.f32 0.0, %v234
  %v236 = vpop.f32.mrf.mxu0
  %v237 = vpop.f32.mrf.mxu0
  %v238 = vadd.f32 0.0, %v237
  %v239 = vpop.f32.mrf.mxu0
  %240 = vmatprep.mubr.bf16.mxu0 0
  %241 = vmatmul.mubr.bf16.gmra.mxu0 %v117
  %v242 = vpop.f32.mrf.mxu0
  %v243 = vadd.f32 0.0, %v242
  %v244 = vpop.f32.mrf.mxu0
  %v245 = vpop.f32.mrf.mxu0
  %v246 = vadd.f32 0.0, %v245
  %v247 = vpop.f32.mrf.mxu0
  %248 = vmatprep.mubr.bf16.mxu0 0
  %249 = vmatmul.mubr.bf16.gmra.mxu0 %v118
  %v250 = vpop.f32.mrf.mxu0
  %v251 = vadd.f32 0.0, %v250
  %v252 = vpop.f32.mrf.mxu0
  %v253 = vpop.f32.mrf.mxu0
  %v254 = vadd.f32 0.0, %v253
  %v255 = vpop.f32.mrf.mxu0
  %256 = vmatprep.mubr.bf16.mxu0 0
  %257 = vmatmul.mubr.bf16.gmra.mxu0 %v119
  %v258 = vpop.f32.mrf.mxu0
  %v259 = vadd.f32 0.0, %v258
  %v260 = vpop.f32.mrf.mxu0
  %v261 = vpop.f32.mrf.mxu0
  %v262 = vadd.f32 0.0, %v261
  %v263 = vpop.f32.mrf.mxu0
  %264 = vdwg.mxu0
  %v281 = vunpack.c.l.b16 %v120
  %v282 = vunpack.c.l.b16 %v121
  %v283 = vunpack.c.l.b16 %v122
  %v284 = vunpack.c.l.b16 %v123
  %v285 = vunpack.c.l.b16 %v124
  %v286 = vunpack.c.l.b16 %v125
  %v287 = vunpack.c.l.b16 %v126
  %v288 = vunpack.c.l.b16 %v127
  %v289 = vunpack.c.l.b16 %v128
  %v290 = vunpack.c.l.b16 %v129
  %v291 = vunpack.c.l.b16 %v130
  %v292 = vunpack.c.l.b16 %v131
  %v293 = vunpack.c.l.b16 %v132
  %v294 = vunpack.c.l.b16 %v133
  %v295 = vunpack.c.l.b16 %v134
  %v296 = vunpack.c.l.b16 %v135
  %v297 = vpack.c.b16 %v282, %v281
  %v298 = vpack.c.b16 %v284, %v283
  %v299 = vpack.c.b16 %v286, %v285
  %v300 = vpack.c.b16 %v288, %v287
  %v301 = vpack.c.b16 %v290, %v289
  %v302 = vpack.c.b16 %v292, %v291
  %v303 = vpack.c.b16 %v294, %v293
  %v304 = vpack.c.b16 %v296, %v295
  %313 = vmatprep.subr.bf16.mxu0 0
  %314 = vmatpush1.bf16.msra.mxu0 %v304
  %315 = vmatprep.subr.bf16.mxu0 0
  %316 = vmatpush1.bf16.msra.mxu0 %v303
  %317 = vmatprep.subr.bf16.mxu0 0
  %318 = vmatpush1.bf16.msra.mxu0 %v302
  %319 = vmatprep.subr.bf16.mxu0 0
  %320 = vmatpush1.bf16.msra.mxu0 %v301
  %321 = vmatprep.subr.bf16.mxu0 0
  %322 = vmatpush1.bf16.msra.mxu0 %v300
  %323 = vmatprep.subr.bf16.mxu0 0
  %324 = vmatpush1.bf16.msra.mxu0 %v299
  %325 = vmatprep.subr.bf16.mxu0 0
  %326 = vmatpush1.bf16.msra.mxu0 %v298
  %327 = vmatprep.subr.bf16.mxu0 0
  %328 = vmatpush1.bf16.msra.mxu0 %v297
  %329 = vmatprep.subr.bf16.mxu0 0
  %330 = vmatpush2.bf16.msra.mxu0 0
  %331 = vmatprep.subr.bf16.mxu0 0
  %332 = vmatpush2.bf16.msra.mxu0 0
  %333 = vmatprep.subr.bf16.mxu0 0
  %334 = vmatpush2.bf16.msra.mxu0 0
  %335 = vmatprep.subr.bf16.mxu0 0
  %336 = vmatpush2.bf16.msra.mxu0 0
  %337 = vmatprep.subr.bf16.mxu0 0
  %338 = vmatpush2.bf16.msra.mxu0 0
  %339 = vmatprep.subr.bf16.mxu0 0
  %340 = vmatpush2.bf16.msra.mxu0 0
  %341 = vmatprep.subr.bf16.mxu0 0
  %342 = vmatpush2.bf16.msra.mxu0 0
  %343 = vmatprep.subr.bf16.mxu0 0
  %344 = vmatpush2.bf16.msra.mxu0 0
  %345 = vmatprep.mubr.bf16.mxu0 0
  %346 = vmatmul.mubr.bf16.gmra.mxu0 %v68
  %v347 = vpop.f32.mrf.mxu0
  %v348 = vadd.f32 %v235, %v347
  %v349 = vpop.f32.mrf.mxu0
  %v350 = vpop.f32.mrf.mxu0
  %v351 = vadd.f32 %v238, %v350
  %v352 = vpop.f32.mrf.mxu0
  %353 = vmatprep.mubr.bf16.mxu0 0
  %354 = vmatmul.mubr.bf16.gmra.mxu0 %v69
  %v355 = vpop.f32.mrf.mxu0
  %v356 = vadd.f32 %v243, %v355
  %v357 = vpop.f32.mrf.mxu0
  %v358 = vpop.f32.mrf.mxu0
  %v359 = vadd.f32 %v246, %v358
  %v360 = vpop.f32.mrf.mxu0
  %361 = vmatprep.mubr.bf16.mxu0 0
  %362 = vmatmul.mubr.bf16.gmra.mxu0 %v70
  %v363 = vpop.f32.mrf.mxu0
  %v364 = vadd.f32 %v251, %v363
  %v365 = vpop.f32.mrf.mxu0
  %v366 = vpop.f32.mrf.mxu0
  %v367 = vadd.f32 %v254, %v366
  %v368 = vpop.f32.mrf.mxu0
  %369 = vmatprep.mubr.bf16.mxu0 0
  %370 = vmatmul.mubr.bf16.gmra.mxu0 %v71
  %v371 = vpop.f32.mrf.mxu0
  %v372 = vadd.f32 %v259, %v371
  %v373 = vpop.f32.mrf.mxu0
  %v374 = vpop.f32.mrf.mxu0
  %v375 = vadd.f32 %v262, %v374
  %v376 = vpop.f32.mrf.mxu0
  %377 = vdwg.mxu0
  %v378 = vld [vmem:[%s5] sm:$0x1]
  %v380 = vlaneseq
  %v381 = vshrl.u32 %v380, 7
  %v382 = vsub.s32 0, %v381
  %v383 = vrot.slane %v378, %v382
  %v385 = vadd.f32 %v348, %v383
  %v386 = vadd.f32 %v351, %v383
  %v387 = vadd.f32 %v356, %v383
  %v388 = vadd.f32 %v359, %v383
  %v389 = vadd.f32 %v364, %v383
  %v390 = vadd.f32 %v367, %v383
  %v391 = vadd.f32 %v372, %v383
  %v392 = vadd.f32 %v375, %v383
  %393 = vst [vmem:[%s6] sm:$0xff] %v385
  %394 = vst [vmem:[%s6 + $0x8] sm:$0xff] %v386
  %395 = vst [vmem:[%s6 + $0x10] sm:$0xff] %v387
  %396 = vst [vmem:[%s6 + $0x18] sm:$0xff] %v388
  %397 = vst [vmem:[%s6 + $0x20] sm:$0xff] %v389
  %398 = vst [vmem:[%s6 + $0x28] sm:$0xff] %v390
  %399 = vst [vmem:[%s6 + $0x30] sm:$0xff] %v391
  %400 = vst [vmem:[%s6 + $0x38] sm:$0xff] %v392
  // Predicated region
  $region26: #{gcn_sampling_forward.8} parent=0 // pred_check
    _
  $region27: #{gcn_sampling_forward.8} parent=0 // pred_check_branch
    %402 = sbr.rel (0) target = $region29
  $region28: #{gcn_sampling_forward.8} parent=0 // pred_region
    _
  $region29: #{gcn_sampling_forward.8} parent=0 // pred_fallthru
    _
  // Predicated region
  $region30: #{gcn_sampling_forward.8} parent=0 // pred_check
    _
  $region31: #{gcn_sampling_forward.8} parent=0 // pred_check_branch
    %404 = sbr.rel (0) target = $region33
  $region32: #{gcn_sampling_forward.8} parent=0 // pred_region
    _
  $region33: #{gcn_sampling_forward.8} parent=0 // pred_fallthru
    _

</llo_original>
